<compile_context>
chip_gen: v7x
topology: tpu7x:2x2x1
jax: 0.10.0
libtpu: 0.0.40
codegen_flags: <defaults>
</compile_context>

<pallas_src>
import functools

import jax
import jax.numpy as jnp
from jax import lax
from jax.experimental import pallas as pl
from jax.experimental.pallas import tpu as pltpu

LANE = 128      # TPU lane tile (last dim)
SUBLANE = 8     # TPU sublane tile (second-to-last dim)


def _round_up(x, m):
    return (x + m - 1) // m * m


def _vmem_limit_bytes():
    """Per-generation scoped-VMEM limit (v7x has only 64 MiB physical/core)."""
    try:
        kind = jax.devices()[0].device_kind.lower()
    except Exception:  # pragma: no cover - defensive
        kind = ""
    if "v7" in kind or "7x" in kind:
        return 48 * 1024 * 1024
    return 64 * 1024 * 1024          # v5e / v6e: 128 MiB physical


def _pick_block_b(B, S, Hp, vmem_budget):
    """Batch-block rows: fill the MXU but keep S*block_b scratch inside VMEM."""
    Bp8 = _round_up(B, SUBLANE)
    per_row = S * Hp * (3 * 4 + 2)            # gx (f32, 3H) + hall (bf16, H)
    cap = (vmem_budget // 3) // max(per_row, 1)
    cap = max(SUBLANE, (cap // SUBLANE) * SUBLANE)
    return min(128, Bp8, cap)


def _gru_fc_kernel(x_ref, drop_ref, wih_ref, whh_ref, bih_ref, bhh_ref,
                   wfc_ref, bfc_ref, out_ref, gx_ref, hall_ref, *,
                   seq_len, block_b, hidden, dropout_scale, apply_dropout,
                   unroll):
    """Fused GRU + dropout + (V-tiled) Linear for one (batch-block, V-tile).

    Grid = (batch blocks ["parallel"], V tiles ["arbitrary"]).
    x_ref    : [S, BB, Ep]     bf16  time-major embedded inputs
    drop_ref : [S, BB, Hp]     bf16  dropout keep-mask in {0,1}
    wih_ref  : [Ep, 3Hp]       bf16  input->gate weights (gate order r|z|n)
    whh_ref  : [Hp, 3Hp]       bf16  hidden->gate weights
    bih_ref, bhh_ref : [1, 3Hp] f32
    wfc_ref  : [Hp, block_v]   bf16  FC weight tile ; bfc_ref : [1, block_v] f32
    out_ref  : [S, BB, block_v]
    gx_ref   : [S, BB, 3Hp]    f32  scratch (precomputed input projections)
    hall_ref : [S, BB, Hp]     bf16 scratch (dropped hidden states; persists
                                    across the V grid axis)
    """
    S, BB, H = seq_len, block_b, hidden
    Ep = x_ref.shape[-1]

    # ---- Phases 1+2 only once per batch block (V tile 0) --------------------
    @pl.when(pl.program_id(1) == 0)
    def _recurrence():
        # Phase 1: input projection for ALL timesteps as one MXU matmul.
        x2 = x_ref[...].reshape(S * BB, Ep)
        gx = jnp.dot(x2, wih_ref[...], preferred_element_type=jnp.float32)
        gx_ref[...] = (gx + bih_ref[...]).reshape(S, BB, 3 * H)

        whh = whh_ref[...]            # bf16, hoisted out of the loop
        b_hh = bhh_ref[...]           # f32

        # Phase 2: the irreducibly-sequential GRU recurrence (f32 carry,
        # bf16 MXU inputs).
        def step(t, h_prev):
            gx_t = gx_ref[t]                                   # [BB, 3H] f32
            gh = jnp.dot(h_prev.astype(jnp.bfloat16), whh,
                         preferred_element_type=jnp.float32) + b_hh
            r = jax.nn.sigmoid(gx_t[:, 0:H] + gh[:, 0:H])
            z = jax.nn.sigmoid(gx_t[:, H:2 * H] + gh[:, H:2 * H])
            n = jnp.tanh(gx_t[:, 2 * H:3 * H] + r * gh[:, 2 * H:3 * H])
            h_new = (1.0 - z) * n + z * h_prev
            hall_ref[t] = h_new.astype(jnp.bfloat16)
            return h_new

        lax.fori_loop(0, S, step, jnp.zeros((BB, H), jnp.float32),
                      unroll=unroll)

        # Dropout applied once, in place, to the bf16 hidden states.
        if apply_dropout:
            hall_ref[...] = hall_ref[...] * drop_ref[...] * dropout_scale

    # ---- Phase 3 (every V tile): hidden @ W_fc tile + bias ------------------
    h_flat = hall_ref[...].reshape(S * BB, H)                   # bf16
    y = jnp.dot(h_flat, wfc_ref[...],
                preferred_element_type=jnp.float32) + bfc_ref[...]
    out_ref[...] = y.reshape(out_ref.shape).astype(out_ref.dtype)


def _prepare_kernel_params(params):
    """Transpose / lane-pad / cast the PyTorch-shaped params for the kernel."""
    w_ih, w_hh = params["w_ih"], params["w_hh"]          # [3H, E], [3H, H]
    b_ih, b_hh = params["b_ih"], params["b_hh"]          # [3H]
    w_fc, b_fc = params["w_fc"], params["b_fc"]          # [V, H], [V]
    E = w_ih.shape[1]
    H = w_hh.shape[1]
    V = w_fc.shape[0]
    Ep = _round_up(E, LANE)
    Hp = _round_up(H, LANE)
    Vp = _round_up(V, LANE)

    def pad2(a, rows, cols):
        return jnp.pad(a, ((0, rows - a.shape[0]), (0, cols - a.shape[1])))

    # PyTorch GRU gate order: r | z | n.
    wih_t = jnp.concatenate(
        [pad2(w_ih[g * H:(g + 1) * H].T, Ep, Hp) for g in range(3)], axis=1)
    whh_t = jnp.concatenate(
        [pad2(w_hh[g * H:(g + 1) * H].T, Hp, Hp) for g in range(3)], axis=1)

    def pad_bias(v):                                           # [H] -> [1, Hp]
        return jnp.pad(v, (0, Hp - v.shape[0]))[None, :]

    bih_p = jnp.concatenate(
        [pad_bias(b_ih[g * H:(g + 1) * H]) for g in range(3)], axis=1)
    bhh_p = jnp.concatenate(
        [pad_bias(b_hh[g * H:(g + 1) * H]) for g in range(3)], axis=1)

    wfc_t = pad2(w_fc.T, Hp, Vp)                               # [Hp, Vp]
    bfc_p = jnp.pad(b_fc, (0, Vp - V))[None, :]                # padded cols -> 0

    return dict(wih_t=wih_t.astype(jnp.bfloat16),
                whh_t=whh_t.astype(jnp.bfloat16),
                bih=bih_p.astype(jnp.float32), bhh=bhh_p.astype(jnp.float32),
                wfc_t=wfc_t.astype(jnp.bfloat16), bfc=bfc_p.astype(jnp.float32),
                E=E, Ep=Ep, H=H, Hp=Hp, V=V, Vp=Vp)


def text_slb_forward(input_batch, params, *, apply_softmax=False,
                     training=True, dropout_seed=0, block_b=None,
                     block_v=None, out_dtype=jnp.float32):
    """Forward pass matching TextSLBModel.forward (batch_first=True)."""
    emb = params["emb"]                                   # [num_embeddings, E]
    kp = _prepare_kernel_params(params)
    B, S = input_batch.shape
    E, Ep, Hp, Vp, V = kp["E"], kp["Ep"], kp["Hp"], kp["Vp"], kp["V"]

    vmem_budget = _vmem_limit_bytes()
    if block_b is None:
        block_b = _pick_block_b(B, S, Hp, vmem_budget)
    block_b = max(SUBLANE, _round_up(block_b, SUBLANE))
    Bp = _round_up(B, block_b)

    if block_v is None:
        block_v = 512 if Vp % 512 == 0 else (256 if Vp % 256 == 0 else 128)
    assert block_v % LANE == 0 and Vp % block_v == 0

    # Embedding gather directly in time-major order (XLA gather in wrapper).
    tok_tm = jnp.swapaxes(input_batch, 0, 1)              # [S, B]
    x_tm = jnp.take(emb, tok_tm, axis=0)                  # [S, B, E]
    x_tm = jnp.pad(x_tm, ((0, 0), (0, Bp - B), (0, Ep - E))).astype(jnp.bfloat16)

    # Dropout p=0.5 keep-mask in bf16 {0,1}; the 1/(1-p) scale is applied
    # inside the kernel.  (F.dropout's default training=True matches the
    # reference forward; set training=False to disable.)
    if training:
        keep = jax.random.bernoulli(jax.random.PRNGKey(dropout_seed), 0.5,
                                    (S, Bp, Hp))
        drop = keep.astype(jnp.bfloat16)
    else:
        drop = jnp.ones((S, Bp, Hp), jnp.bfloat16)

    unroll = True if S <= 32 else 8
    kernel = functools.partial(_gru_fc_kernel, seq_len=S, block_b=block_b,
                               hidden=Hp, dropout_scale=2.0,
                               apply_dropout=training, unroll=unroll)

    grid = (Bp // block_b, Vp // block_v)

    def bblock(last):
        return pl.BlockSpec((S, block_b, last), lambda j, v: (0, j, 0))

    def weight_spec(arr):
        # Grid-invariant weights (fully resident; small after V tiling).
        return pl.BlockSpec(arr.shape, lambda j, v: (0, 0))

    out_tm = pl.pallas_call(
        kernel,
        out_shape=jax.ShapeDtypeStruct((S, Bp, Vp), out_dtype),
        grid=grid,
        in_specs=[bblock(Ep),                              # x  (time-major)
                  bblock(Hp),                              # dropout keep-mask
                  weight_spec(kp["wih_t"]),
                  weight_spec(kp["whh_t"]),
                  weight_spec(kp["bih"]),
                  weight_spec(kp["bhh"]),
                  pl.BlockSpec((Hp, block_v), lambda j, v: (0, v)),   # W_fc tile
                  pl.BlockSpec((1, block_v), lambda j, v: (0, v))],   # b_fc tile
        out_specs=pl.BlockSpec((S, block_b, block_v), lambda j, v: (0, j, v)),
        scratch_shapes=[pltpu.VMEM((S, block_b, 3 * Hp), jnp.float32),  # gx
                        pltpu.VMEM((S, block_b, Hp), jnp.bfloat16)],    # hall
        compiler_params=pltpu.CompilerParams(
            dimension_semantics=("parallel", "arbitrary"),
            vmem_limit_bytes=vmem_budget),
    )(x_tm, drop, kp["wih_t"], kp["whh_t"], kp["bih"], kp["bhh"],
      kp["wfc_t"], kp["bfc"])

    # Strip batch/vocab padding, return batch-first [B, S, V].
    y = jnp.transpose(out_tm[:, :B, :V], (1, 0, 2))
    if apply_softmax:
        # Softmax is applied in XLA on the un-padded logits so the kernel's FC
        # can stay V-tiled; numerically identical to softmax-in-kernel.
        y = jax.nn.softmax(y.astype(jnp.float32), axis=-1).astype(out_dtype)
    return y


def _reference_forward(input_batch, params, *, apply_softmax=False):
    """Pure-JAX f32 reference (eval mode: dropout is the identity)."""
    emb, w_ih, w_hh = params["emb"], params["w_ih"], params["w_hh"]
    b_ih, b_hh = params["b_ih"], params["b_hh"]
    w_fc, b_fc = params["w_fc"], params["b_fc"]
    H = w_hh.shape[1]
    x = jnp.take(emb, input_batch, axis=0)                 # [B, S, E]

    def cell(h, x_t):
        gx = x_t @ w_ih.T + b_ih
        gh = h @ w_hh.T + b_hh
        r = jax.nn.sigmoid(gx[:, :H] + gh[:, :H])
        z = jax.nn.sigmoid(gx[:, H:2 * H] + gh[:, H:2 * H])
        n = jnp.tanh(gx[:, 2 * H:] + r * gh[:, 2 * H:])
        h = (1.0 - z) * n + z * h
        return h, h

    h0 = jnp.zeros((x.shape[0], H), jnp.float32)
    _, hs = lax.scan(cell, h0, jnp.swapaxes(x, 0, 1))      # [S, B, H]
    y = jnp.swapaxes(hs, 0, 1) @ w_fc.T + b_fc
    if apply_softmax:
        y = jax.nn.softmax(y, axis=-1)
    return y


def init_params(key, num_embeddings, embedding_dim, rnn_hidden_size,
                padding_idx=0):
    """Deterministic synthetic parameters with the PyTorch module's shapes."""
    V, E, H = num_embeddings, embedding_dim, rnn_hidden_size
    ks = jax.random.split(key, 7)
    s = 0.1
    emb = s * jax.random.normal(ks[0], (V, E), jnp.float32)
    emb = emb.at[padding_idx].set(0.0)       # nn.Embedding zeroes the padding row
    w_ih = s * jax.random.normal(ks[1], (3 * H, E), jnp.float32)   # gates r|z|n
    w_hh = s * jax.random.normal(ks[2], (3 * H, H), jnp.float32)
    b_ih = s * jax.random.normal(ks[3], (3 * H,), jnp.float32)
    b_hh = s * jax.random.normal(ks[4], (3 * H,), jnp.float32)
    w_fc = s * jax.random.normal(ks[5], (V, H), jnp.float32)       # Linear [out,in]
    b_fc = s * jax.random.normal(ks[6], (V,), jnp.float32)
    return dict(emb=emb, w_ih=w_ih, w_hh=w_hh, b_ih=b_ih, b_hh=b_hh,
                w_fc=w_fc, b_fc=b_fc)


if __name__ == "__main__":
    num_embeddings = 32     # vocabulary size (= FC output size)
    embedding_dim = 32
    rnn_hidden_size = 32
    batch, seq = 2, 8

    key = jax.random.PRNGKey(0)
    k_params, k_tokens = jax.random.split(key)
    params = init_params(k_params, num_embeddings, embedding_dim,
                         rnn_hidden_size, padding_idx=0)
    input_batch = jax.random.randint(k_tokens, (batch, seq), 0,
                                     num_embeddings, dtype=jnp.int32)

    # Correctness check vs. an f32 pure-JAX reference (eval mode: no dropout).
    y_eval = jax.block_until_ready(
        text_slb_forward(input_batch, params, apply_softmax=False,
                         training=False))
    y_ref = _reference_forward(input_batch, params, apply_softmax=False)
    assert y_eval.shape == y_ref.shape
    assert bool(jnp.allclose(y_eval, y_ref, rtol=2e-2, atol=2e-2)), (
        float(jnp.max(jnp.abs(y_eval - y_ref))))

    # Reference-default path (dropout active, as in F.dropout's default).
    y = text_slb_forward(input_batch, params, apply_softmax=False,
                         training=True, dropout_seed=0)
    y = jax.block_until_ready(y)

    assert y.shape == (batch, seq, num_embeddings), y.shape
    assert y.dtype == jnp.float32
    assert bool(jnp.all(jnp.isfinite(y)))
    print("KERNEL_OK")
</pallas_src>

<mosaic_0001>
module attributes {stable_mosaic.version = 11 : i64} {
  func.func @_gru_fc_kernel(%arg0: i32, %arg1: i32, %arg2: memref<8x8x128xbf16, #tpu.memory_space<vmem>>, %arg3: memref<8x8x128xbf16, #tpu.memory_space<vmem>>, %arg4: memref<128x384xbf16, #tpu.memory_space<vmem>>, %arg5: memref<128x384xbf16, #tpu.memory_space<vmem>>, %arg6: memref<1x384xf32, #tpu.memory_space<vmem>>, %arg7: memref<1x384xf32, #tpu.memory_space<vmem>>, %arg8: memref<128x128xbf16, #tpu.memory_space<vmem>>, %arg9: memref<1x128xf32, #tpu.memory_space<vmem>>, %arg10: memref<8x8x128xf32, #tpu.memory_space<vmem>>, %arg11: memref<8x8x384xf32, #tpu.memory_space<vmem>>, %arg12: memref<8x8x128xbf16, #tpu.memory_space<vmem>>) attributes {dimension_semantics = [#tpu.dimension_semantics<parallel>, #tpu.dimension_semantics<arbitrary>], iteration_bounds = array<i64: 1, 1>, scalar_prefetch = 0 : i64, scratch_operands = 2 : i64, tpu.core_type = #tpu.core_type<tc>, window_params = [{transform_indices = @transform_0, window_bounds = array<i64: 8, 8, 128>}, {transform_indices = @transform_1, window_bounds = array<i64: 8, 8, 128>}, {pipeline_mode = #tpu.pipeline_mode<synchronous>, transform_indices = @transform_2, window_bounds = array<i64: 128, 384>}, {pipeline_mode = #tpu.pipeline_mode<synchronous>, transform_indices = @transform_3, window_bounds = array<i64: 128, 384>}, {pipeline_mode = #tpu.pipeline_mode<synchronous>, transform_indices = @transform_4, window_bounds = array<i64: 1, 384>}, {pipeline_mode = #tpu.pipeline_mode<synchronous>, transform_indices = @transform_5, window_bounds = array<i64: 1, 384>}, {transform_indices = @transform_6, window_bounds = array<i64: 128, 128>}, {transform_indices = @transform_7, window_bounds = array<i64: 1, 128>}, {transform_indices = @transform_8, window_bounds = array<i64: 8, 8, 128>}]} {
    %c0_i32 = arith.constant 0 : i32
    %0 = arith.cmpi eq, %arg1, %c0_i32 : i32
    %1 = arith.extui %0 : i1 to i32
    %c0_i32_0 = arith.constant 0 : i32
    %2 = arith.cmpi ne, %1, %c0_i32_0 : i32
    scf.if %2 {
      %c0_10 = arith.constant 0 : index
      %c0_11 = arith.constant 0 : index
      %c0_12 = arith.constant 0 : index
      %12 = vector.load %arg2[%c0_10, %c0_11, %c0_12] : memref<8x8x128xbf16, #tpu.memory_space<vmem>>, vector<8x8x128xbf16>
      %13 = vector.shape_cast %12 : vector<8x8x128xbf16> to vector<64x128xbf16>
      %c0_13 = arith.constant 0 : index
      %c0_14 = arith.constant 0 : index
      %14 = vector.load %arg4[%c0_13, %c0_14] : memref<128x384xbf16, #tpu.memory_space<vmem>>, vector<128x384xbf16>
      %cst_15 = arith.constant dense<0.000000e+00> : vector<64x384xf32>
      %15 = tpu.matmul %13, %14, %cst_15 {dimension_numbers = #tpu.dot_dimension_numbers<[1], [0], [0], [1], [0, 0, 1, 1], [], []>} : vector<64x128xbf16>, vector<128x384xbf16>, vector<64x384xf32> -> vector<64x384xf32>
      %c0_16 = arith.constant 0 : index
      %c0_17 = arith.constant 0 : index
      %16 = vector.load %arg6[%c0_16, %c0_17] : memref<1x384xf32, #tpu.memory_space<vmem>>, vector<1x384xf32>
      %17 = vector.broadcast %16 : vector<1x384xf32> to vector<64x384xf32>
      %18 = arith.addf %15, %17 : vector<64x384xf32>
      %19 = vector.shape_cast %18 : vector<64x384xf32> to vector<8x8x384xf32>
      %c0_18 = arith.constant 0 : index
      %c0_19 = arith.constant 0 : index
      %c0_20 = arith.constant 0 : index
      %20 = vector.load %arg11[%c0_18, %c0_19, %c0_20] : memref<8x8x384xf32, #tpu.memory_space<vmem>>, vector<8x8x384xf32>
      tpu.vector_store %arg11[%c0_18, %c0_19, %c0_20], %19 {strides = array<i32>} : memref<8x8x384xf32, #tpu.memory_space<vmem>>, vector<8x8x384xf32>,
      %c0_21 = arith.constant 0 : index
      %c0_22 = arith.constant 0 : index
      %21 = vector.load %arg5[%c0_21, %c0_22] : memref<128x384xbf16, #tpu.memory_space<vmem>>, vector<128x384xbf16>
      %c0_23 = arith.constant 0 : index
      %c0_24 = arith.constant 0 : index
      %22 = vector.load %arg7[%c0_23, %c0_24] : memref<1x384xf32, #tpu.memory_space<vmem>>, vector<1x384xf32>
      %cst_25 = arith.constant 0.000000e+00 : f32
      %23 = vector.broadcast %cst_25 : f32 to vector<8x128xf32>
      %c0_i32_26 = arith.constant 0 : i32
      %24 = arith.index_cast %c0_i32_26 : i32 to index
      %c0_27 = arith.constant 0 : index
      %c0_28 = arith.constant 0 : index
      %25 = vector.load %arg11[%24, %c0_27, %c0_28] : memref<8x8x384xf32, #tpu.memory_space<vmem>>, vector<1x8x384xf32>
      %26 = vector.shape_cast %25 : vector<1x8x384xf32> to vector<8x384xf32>
      %27 = arith.truncf %23 : vector<8x128xf32> to vector<8x128xbf16>
      %cst_29 = arith.constant dense<0.000000e+00> : vector<8x384xf32>
      %28 = tpu.matmul %27, %21, %cst_29 {dimension_numbers = #tpu.dot_dimension_numbers<[1], [0], [0], [1], [0, 0, 1, 1], [], []>} : vector<8x128xbf16>, vector<128x384xbf16>, vector<8x384xf32> -> vector<8x384xf32>
      %29 = vector.broadcast %22 : vector<1x384xf32> to vector<8x384xf32>
      %30 = arith.addf %28, %29 : vector<8x384xf32>
      %31 = vector.extract_strided_slice %26 {offsets = [0, 0], sizes = [8, 128], strides = [1, 1]} : vector<8x384xf32> to vector<8x128xf32>
      %32 = vector.extract_strided_slice %30 {offsets = [0, 0], sizes = [8, 128], strides = [1, 1]} : vector<8x384xf32> to vector<8x128xf32>
      %33 = arith.addf %31, %32 : vector<8x128xf32>
      %34 = arith.negf %33 : vector<8x128xf32>
      %35 = math.exp %34 : vector<8x128xf32>
      %cst_30 = arith.constant 1.000000e+00 : f32
      %36 = vector.broadcast %cst_30 : f32 to vector<8x128xf32>
      %37 = arith.addf %36, %35 : vector<8x128xf32>
      %38 = arith.divf %36, %37 : vector<8x128xf32>
      %39 = vector.extract_strided_slice %26 {offsets = [0, 128], sizes = [8, 128], strides = [1, 1]} : vector<8x384xf32> to vector<8x128xf32>
      %40 = vector.extract_strided_slice %30 {offsets = [0, 128], sizes = [8, 128], strides = [1, 1]} : vector<8x384xf32> to vector<8x128xf32>
      %41 = arith.addf %39, %40 : vector<8x128xf32>
      %42 = arith.negf %41 : vector<8x128xf32>
      %43 = math.exp %42 : vector<8x128xf32>
      %cst_31 = arith.constant 1.000000e+00 : f32
      %44 = vector.broadcast %cst_31 : f32 to vector<8x128xf32>
      %45 = arith.addf %44, %43 : vector<8x128xf32>
      %46 = arith.divf %44, %45 : vector<8x128xf32>
      %47 = vector.extract_strided_slice %26 {offsets = [0, 256], sizes = [8, 128], strides = [1, 1]} : vector<8x384xf32> to vector<8x128xf32>
      %48 = vector.extract_strided_slice %30 {offsets = [0, 256], sizes = [8, 128], strides = [1, 1]} : vector<8x384xf32> to vector<8x128xf32>
      %49 = arith.mulf %38, %48 : vector<8x128xf32>
      %50 = arith.addf %47, %49 : vector<8x128xf32>
      %51 = math.tanh %50 : vector<8x128xf32>
      %cst_32 = arith.constant 1.000000e+00 : f32
      %52 = vector.broadcast %cst_32 : f32 to vector<8x128xf32>
      %53 = arith.subf %52, %46 : vector<8x128xf32>
      %54 = arith.mulf %53, %51 : vector<8x128xf32>
      %55 = arith.mulf %46, %23 : vector<8x128xf32>
      %56 = arith.addf %54, %55 : vector<8x128xf32>
      %57 = arith.truncf %56 : vector<8x128xf32> to vector<8x128xbf16>
      %58 = arith.index_cast %c0_i32_26 : i32 to index
      %c0_33 = arith.constant 0 : index
      %c0_34 = arith.constant 0 : index
      %59 = vector.load %arg12[%58, %c0_33, %c0_34] : memref<8x8x128xbf16, #tpu.memory_space<vmem>>, vector<1x8x128xbf16>
      %60 = vector.shape_cast %59 : vector<1x8x128xbf16> to vector<8x128xbf16>
      %61 = vector.shape_cast %57 : vector<8x128xbf16> to vector<1x8x128xbf16>
      tpu.vector_store %arg12[%58, %c0_33, %c0_34], %61 {strides = array<i32>} : memref<8x8x128xbf16, #tpu.memory_space<vmem>>, vector<1x8x128xbf16>,
      %c1_i32 = arith.constant 1 : i32
      %62 = arith.index_cast %c1_i32 : i32 to index
      %c0_35 = arith.constant 0 : index
      %c0_36 = arith.constant 0 : index
      %63 = vector.load %arg11[%62, %c0_35, %c0_36] : memref<8x8x384xf32, #tpu.memory_space<vmem>>, vector<1x8x384xf32>
      %64 = vector.shape_cast %63 : vector<1x8x384xf32> to vector<8x384xf32>
      %65 = arith.truncf %56 : vector<8x128xf32> to vector<8x128xbf16>
      %cst_37 = arith.constant dense<0.000000e+00> : vector<8x384xf32>
      %66 = tpu.matmul %65, %21, %cst_37 {dimension_numbers = #tpu.dot_dimension_numbers<[1], [0], [0], [1], [0, 0, 1, 1], [], []>} : vector<8x128xbf16>, vector<128x384xbf16>, vector<8x384xf32> -> vector<8x384xf32>
      %67 = vector.broadcast %22 : vector<1x384xf32> to vector<8x384xf32>
      %68 = arith.addf %66, %67 : vector<8x384xf32>
      %69 = vector.extract_strided_slice %64 {offsets = [0, 0], sizes = [8, 128], strides = [1, 1]} : vector<8x384xf32> to vector<8x128xf32>
      %70 = vector.extract_strided_slice %68 {offsets = [0, 0], sizes = [8, 128], strides = [1, 1]} : vector<8x384xf32> to vector<8x128xf32>
      %71 = arith.addf %69, %70 : vector<8x128xf32>
      %72 = arith.negf %71 : vector<8x128xf32>
      %73 = math.exp %72 : vector<8x128xf32>
      %cst_38 = arith.constant 1.000000e+00 : f32
      %74 = vector.broadcast %cst_38 : f32 to vector<8x128xf32>
      %75 = arith.addf %74, %73 : vector<8x128xf32>
      %76 = arith.divf %74, %75 : vector<8x128xf32>
      %77 = vector.extract_strided_slice %64 {offsets = [0, 128], sizes = [8, 128], strides = [1, 1]} : vector<8x384xf32> to vector<8x128xf32>
      %78 = vector.extract_strided_slice %68 {offsets = [0, 128], sizes = [8, 128], strides = [1, 1]} : vector<8x384xf32> to vector<8x128xf32>
      %79 = arith.addf %77, %78 : vector<8x128xf32>
      %80 = arith.negf %79 : vector<8x128xf32>
      %81 = math.exp %80 : vector<8x128xf32>
      %cst_39 = arith.constant 1.000000e+00 : f32
      %82 = vector.broadcast %cst_39 : f32 to vector<8x128xf32>
      %83 = arith.addf %82, %81 : vector<8x128xf32>
      %84 = arith.divf %82, %83 : vector<8x128xf32>
      %85 = vector.extract_strided_slice %64 {offsets = [0, 256], sizes = [8, 128], strides = [1, 1]} : vector<8x384xf32> to vector<8x128xf32>
      %86 = vector.extract_strided_slice %68 {offsets = [0, 256], sizes = [8, 128], strides = [1, 1]} : vector<8x384xf32> to vector<8x128xf32>
      %87 = arith.mulf %76, %86 : vector<8x128xf32>
      %88 = arith.addf %85, %87 : vector<8x128xf32>
      %89 = math.tanh %88 : vector<8x128xf32>
      %cst_40 = arith.constant 1.000000e+00 : f32
      %90 = vector.broadcast %cst_40 : f32 to vector<8x128xf32>
      %91 = arith.subf %90, %84 : vector<8x128xf32>
      %92 = arith.mulf %91, %89 : vector<8x128xf32>
      %93 = arith.mulf %84, %56 : vector<8x128xf32>
      %94 = arith.addf %92, %93 : vector<8x128xf32>
      %95 = arith.truncf %94 : vector<8x128xf32> to vector<8x128xbf16>
      %96 = arith.index_cast %c1_i32 : i32 to index
      %c0_41 = arith.constant 0 : index
      %c0_42 = arith.constant 0 : index
      %97 = vector.load %arg12[%96, %c0_41, %c0_42] : memref<8x8x128xbf16, #tpu.memory_space<vmem>>, vector<1x8x128xbf16>
      %98 = vector.shape_cast %97 : vector<1x8x128xbf16> to vector<8x128xbf16>
      %99 = vector.shape_cast %95 : vector<8x128xbf16> to vector<1x8x128xbf16>
      tpu.vector_store %arg12[%96, %c0_41, %c0_42], %99 {strides = array<i32>} : memref<8x8x128xbf16, #tpu.memory_space<vmem>>, vector<1x8x128xbf16>,
      %c2_i32 = arith.constant 2 : i32
      %100 = arith.index_cast %c2_i32 : i32 to index
      %c0_43 = arith.constant 0 : index
      %c0_44 = arith.constant 0 : index
      %101 = vector.load %arg11[%100, %c0_43, %c0_44] : memref<8x8x384xf32, #tpu.memory_space<vmem>>, vector<1x8x384xf32>
      %102 = vector.shape_cast %101 : vector<1x8x384xf32> to vector<8x384xf32>
      %103 = arith.truncf %94 : vector<8x128xf32> to vector<8x128xbf16>
      %cst_45 = arith.constant dense<0.000000e+00> : vector<8x384xf32>
      %104 = tpu.matmul %103, %21, %cst_45 {dimension_numbers = #tpu.dot_dimension_numbers<[1], [0], [0], [1], [0, 0, 1, 1], [], []>} : vector<8x128xbf16>, vector<128x384xbf16>, vector<8x384xf32> -> vector<8x384xf32>
      %105 = vector.broadcast %22 : vector<1x384xf32> to vector<8x384xf32>
      %106 = arith.addf %104, %105 : vector<8x384xf32>
      %107 = vector.extract_strided_slice %102 {offsets = [0, 0], sizes = [8, 128], strides = [1, 1]} : vector<8x384xf32> to vector<8x128xf32>
      %108 = vector.extract_strided_slice %106 {offsets = [0, 0], sizes = [8, 128], strides = [1, 1]} : vector<8x384xf32> to vector<8x128xf32>
      %109 = arith.addf %107, %108 : vector<8x128xf32>
      %110 = arith.negf %109 : vector<8x128xf32>
      %111 = math.exp %110 : vector<8x128xf32>
      %cst_46 = arith.constant 1.000000e+00 : f32
      %112 = vector.broadcast %cst_46 : f32 to vector<8x128xf32>
      %113 = arith.addf %112, %111 : vector<8x128xf32>
      %114 = arith.divf %112, %113 : vector<8x128xf32>
      %115 = vector.extract_strided_slice %102 {offsets = [0, 128], sizes = [8, 128], strides = [1, 1]} : vector<8x384xf32> to vector<8x128xf32>
      %116 = vector.extract_strided_slice %106 {offsets = [0, 128], sizes = [8, 128], strides = [1, 1]} : vector<8x384xf32> to vector<8x128xf32>
      %117 = arith.addf %115, %116 : vector<8x128xf32>
      %118 = arith.negf %117 : vector<8x128xf32>
      %119 = math.exp %118 : vector<8x128xf32>
      %cst_47 = arith.constant 1.000000e+00 : f32
      %120 = vector.broadcast %cst_47 : f32 to vector<8x128xf32>
      %121 = arith.addf %120, %119 : vector<8x128xf32>
      %122 = arith.divf %120, %121 : vector<8x128xf32>
      %123 = vector.extract_strided_slice %102 {offsets = [0, 256], sizes = [8, 128], strides = [1, 1]} : vector<8x384xf32> to vector<8x128xf32>
      %124 = vector.extract_strided_slice %106 {offsets = [0, 256], sizes = [8, 128], strides = [1, 1]} : vector<8x384xf32> to vector<8x128xf32>
      %125 = arith.mulf %114, %124 : vector<8x128xf32>
      %126 = arith.addf %123, %125 : vector<8x128xf32>
      %127 = math.tanh %126 : vector<8x128xf32>
      %cst_48 = arith.constant 1.000000e+00 : f32
      %128 = vector.broadcast %cst_48 : f32 to vector<8x128xf32>
      %129 = arith.subf %128, %122 : vector<8x128xf32>
      %130 = arith.mulf %129, %127 : vector<8x128xf32>
      %131 = arith.mulf %122, %94 : vector<8x128xf32>
      %132 = arith.addf %130, %131 : vector<8x128xf32>
      %133 = arith.truncf %132 : vector<8x128xf32> to vector<8x128xbf16>
      %134 = arith.index_cast %c2_i32 : i32 to index
      %c0_49 = arith.constant 0 : index
      %c0_50 = arith.constant 0 : index
      %135 = vector.load %arg12[%134, %c0_49, %c0_50] : memref<8x8x128xbf16, #tpu.memory_space<vmem>>, vector<1x8x128xbf16>
      %136 = vector.shape_cast %135 : vector<1x8x128xbf16> to vector<8x128xbf16>
      %137 = vector.shape_cast %133 : vector<8x128xbf16> to vector<1x8x128xbf16>
      tpu.vector_store %arg12[%134, %c0_49, %c0_50], %137 {strides = array<i32>} : memref<8x8x128xbf16, #tpu.memory_space<vmem>>, vector<1x8x128xbf16>,
      %c3_i32 = arith.constant 3 : i32
      %138 = arith.index_cast %c3_i32 : i32 to index
      %c0_51 = arith.constant 0 : index
      %c0_52 = arith.constant 0 : index
      %139 = vector.load %arg11[%138, %c0_51, %c0_52] : memref<8x8x384xf32, #tpu.memory_space<vmem>>, vector<1x8x384xf32>
      %140 = vector.shape_cast %139 : vector<1x8x384xf32> to vector<8x384xf32>
      %141 = arith.truncf %132 : vector<8x128xf32> to vector<8x128xbf16>
      %cst_53 = arith.constant dense<0.000000e+00> : vector<8x384xf32>
      %142 = tpu.matmul %141, %21, %cst_53 {dimension_numbers = #tpu.dot_dimension_numbers<[1], [0], [0], [1], [0, 0, 1, 1], [], []>} : vector<8x128xbf16>, vector<128x384xbf16>, vector<8x384xf32> -> vector<8x384xf32>
      %143 = vector.broadcast %22 : vector<1x384xf32> to vector<8x384xf32>
      %144 = arith.addf %142, %143 : vector<8x384xf32>
      %145 = vector.extract_strided_slice %140 {offsets = [0, 0], sizes = [8, 128], strides = [1, 1]} : vector<8x384xf32> to vector<8x128xf32>
      %146 = vector.extract_strided_slice %144 {offsets = [0, 0], sizes = [8, 128], strides = [1, 1]} : vector<8x384xf32> to vector<8x128xf32>
      %147 = arith.addf %145, %146 : vector<8x128xf32>
      %148 = arith.negf %147 : vector<8x128xf32>
      %149 = math.exp %148 : vector<8x128xf32>
      %cst_54 = arith.constant 1.000000e+00 : f32
      %150 = vector.broadcast %cst_54 : f32 to vector<8x128xf32>
      %151 = arith.addf %150, %149 : vector<8x128xf32>
      %152 = arith.divf %150, %151 : vector<8x128xf32>
      %153 = vector.extract_strided_slice %140 {offsets = [0, 128], sizes = [8, 128], strides = [1, 1]} : vector<8x384xf32> to vector<8x128xf32>
      %154 = vector.extract_strided_slice %144 {offsets = [0, 128], sizes = [8, 128], strides = [1, 1]} : vector<8x384xf32> to vector<8x128xf32>
      %155 = arith.addf %153, %154 : vector<8x128xf32>
      %156 = arith.negf %155 : vector<8x128xf32>
      %157 = math.exp %156 : vector<8x128xf32>
      %cst_55 = arith.constant 1.000000e+00 : f32
      %158 = vector.broadcast %cst_55 : f32 to vector<8x128xf32>
      %159 = arith.addf %158, %157 : vector<8x128xf32>
      %160 = arith.divf %158, %159 : vector<8x128xf32>
      %161 = vector.extract_strided_slice %140 {offsets = [0, 256], sizes = [8, 128], strides = [1, 1]} : vector<8x384xf32> to vector<8x128xf32>
      %162 = vector.extract_strided_slice %144 {offsets = [0, 256], sizes = [8, 128], strides = [1, 1]} : vector<8x384xf32> to vector<8x128xf32>
      %163 = arith.mulf %152, %162 : vector<8x128xf32>
      %164 = arith.addf %161, %163 : vector<8x128xf32>
      %165 = math.tanh %164 : vector<8x128xf32>
      %cst_56 = arith.constant 1.000000e+00 : f32
      %166 = vector.broadcast %cst_56 : f32 to vector<8x128xf32>
      %167 = arith.subf %166, %160 : vector<8x128xf32>
      %168 = arith.mulf %167, %165 : vector<8x128xf32>
      %169 = arith.mulf %160, %132 : vector<8x128xf32>
      %170 = arith.addf %168, %169 : vector<8x128xf32>
      %171 = arith.truncf %170 : vector<8x128xf32> to vector<8x128xbf16>
      %172 = arith.index_cast %c3_i32 : i32 to index
      %c0_57 = arith.constant 0 : index
      %c0_58 = arith.constant 0 : index
      %173 = vector.load %arg12[%172, %c0_57, %c0_58] : memref<8x8x128xbf16, #tpu.memory_space<vmem>>, vector<1x8x128xbf16>
      %174 = vector.shape_cast %173 : vector<1x8x128xbf16> to vector<8x128xbf16>
      %175 = vector.shape_cast %171 : vector<8x128xbf16> to vector<1x8x128xbf16>
      tpu.vector_store %arg12[%172, %c0_57, %c0_58], %175 {strides = array<i32>} : memref<8x8x128xbf16, #tpu.memory_space<vmem>>, vector<1x8x128xbf16>,
      %c4_i32 = arith.constant 4 : i32
      %176 = arith.index_cast %c4_i32 : i32 to index
      %c0_59 = arith.constant 0 : index
      %c0_60 = arith.constant 0 : index
      %177 = vector.load %arg11[%176, %c0_59, %c0_60] : memref<8x8x384xf32, #tpu.memory_space<vmem>>, vector<1x8x384xf32>
      %178 = vector.shape_cast %177 : vector<1x8x384xf32> to vector<8x384xf32>
      %179 = arith.truncf %170 : vector<8x128xf32> to vector<8x128xbf16>
      %cst_61 = arith.constant dense<0.000000e+00> : vector<8x384xf32>
      %180 = tpu.matmul %179, %21, %cst_61 {dimension_numbers = #tpu.dot_dimension_numbers<[1], [0], [0], [1], [0, 0, 1, 1], [], []>} : vector<8x128xbf16>, vector<128x384xbf16>, vector<8x384xf32> -> vector<8x384xf32>
      %181 = vector.broadcast %22 : vector<1x384xf32> to vector<8x384xf32>
      %182 = arith.addf %180, %181 : vector<8x384xf32>
      %183 = vector.extract_strided_slice %178 {offsets = [0, 0], sizes = [8, 128], strides = [1, 1]} : vector<8x384xf32> to vector<8x128xf32>
      %184 = vector.extract_strided_slice %182 {offsets = [0, 0], sizes = [8, 128], strides = [1, 1]} : vector<8x384xf32> to vector<8x128xf32>
      %185 = arith.addf %183, %184 : vector<8x128xf32>
      %186 = arith.negf %185 : vector<8x128xf32>
      %187 = math.exp %186 : vector<8x128xf32>
      %cst_62 = arith.constant 1.000000e+00 : f32
      %188 = vector.broadcast %cst_62 : f32 to vector<8x128xf32>
      %189 = arith.addf %188, %187 : vector<8x128xf32>
      %190 = arith.divf %188, %189 : vector<8x128xf32>
      %191 = vector.extract_strided_slice %178 {offsets = [0, 128], sizes = [8, 128], strides = [1, 1]} : vector<8x384xf32> to vector<8x128xf32>
      %192 = vector.extract_strided_slice %182 {offsets = [0, 128], sizes = [8, 128], strides = [1, 1]} : vector<8x384xf32> to vector<8x128xf32>
      %193 = arith.addf %191, %192 : vector<8x128xf32>
      %194 = arith.negf %193 : vector<8x128xf32>
      %195 = math.exp %194 : vector<8x128xf32>
      %cst_63 = arith.constant 1.000000e+00 : f32
      %196 = vector.broadcast %cst_63 : f32 to vector<8x128xf32>
      %197 = arith.addf %196, %195 : vector<8x128xf32>
      %198 = arith.divf %196, %197 : vector<8x128xf32>
      %199 = vector.extract_strided_slice %178 {offsets = [0, 256], sizes = [8, 128], strides = [1, 1]} : vector<8x384xf32> to vector<8x128xf32>
      %200 = vector.extract_strided_slice %182 {offsets = [0, 256], sizes = [8, 128], strides = [1, 1]} : vector<8x384xf32> to vector<8x128xf32>
      %201 = arith.mulf %190, %200 : vector<8x128xf32>
      %202 = arith.addf %199, %201 : vector<8x128xf32>
      %203 = math.tanh %202 : vector<8x128xf32>
      %cst_64 = arith.constant 1.000000e+00 : f32
      %204 = vector.broadcast %cst_64 : f32 to vector<8x128xf32>
      %205 = arith.subf %204, %198 : vector<8x128xf32>
      %206 = arith.mulf %205, %203 : vector<8x128xf32>
      %207 = arith.mulf %198, %170 : vector<8x128xf32>
      %208 = arith.addf %206, %207 : vector<8x128xf32>
      %209 = arith.truncf %208 : vector<8x128xf32> to vector<8x128xbf16>
      %210 = arith.index_cast %c4_i32 : i32 to index
      %c0_65 = arith.constant 0 : index
      %c0_66 = arith.constant 0 : index
      %211 = vector.load %arg12[%210, %c0_65, %c0_66] : memref<8x8x128xbf16, #tpu.memory_space<vmem>>, vector<1x8x128xbf16>
      %212 = vector.shape_cast %211 : vector<1x8x128xbf16> to vector<8x128xbf16>
      %213 = vector.shape_cast %209 : vector<8x128xbf16> to vector<1x8x128xbf16>
      tpu.vector_store %arg12[%210, %c0_65, %c0_66], %213 {strides = array<i32>} : memref<8x8x128xbf16, #tpu.memory_space<vmem>>, vector<1x8x128xbf16>,
      %c5_i32 = arith.constant 5 : i32
      %214 = arith.index_cast %c5_i32 : i32 to index
      %c0_67 = arith.constant 0 : index
      %c0_68 = arith.constant 0 : index
      %215 = vector.load %arg11[%214, %c0_67, %c0_68] : memref<8x8x384xf32, #tpu.memory_space<vmem>>, vector<1x8x384xf32>
      %216 = vector.shape_cast %215 : vector<1x8x384xf32> to vector<8x384xf32>
      %217 = arith.truncf %208 : vector<8x128xf32> to vector<8x128xbf16>
      %cst_69 = arith.constant dense<0.000000e+00> : vector<8x384xf32>
      %218 = tpu.matmul %217, %21, %cst_69 {dimension_numbers = #tpu.dot_dimension_numbers<[1], [0], [0], [1], [0, 0, 1, 1], [], []>} : vector<8x128xbf16>, vector<128x384xbf16>, vector<8x384xf32> -> vector<8x384xf32>
      %219 = vector.broadcast %22 : vector<1x384xf32> to vector<8x384xf32>
      %220 = arith.addf %218, %219 : vector<8x384xf32>
      %221 = vector.extract_strided_slice %216 {offsets = [0, 0], sizes = [8, 128], strides = [1, 1]} : vector<8x384xf32> to vector<8x128xf32>
      %222 = vector.extract_strided_slice %220 {offsets = [0, 0], sizes = [8, 128], strides = [1, 1]} : vector<8x384xf32> to vector<8x128xf32>
      %223 = arith.addf %221, %222 : vector<8x128xf32>
      %224 = arith.negf %223 : vector<8x128xf32>
      %225 = math.exp %224 : vector<8x128xf32>
      %cst_70 = arith.constant 1.000000e+00 : f32
      %226 = vector.broadcast %cst_70 : f32 to vector<8x128xf32>
      %227 = arith.addf %226, %225 : vector<8x128xf32>
      %228 = arith.divf %226, %227 : vector<8x128xf32>
      %229 = vector.extract_strided_slice %216 {offsets = [0, 128], sizes = [8, 128], strides = [1, 1]} : vector<8x384xf32> to vector<8x128xf32>
      %230 = vector.extract_strided_slice %220 {offsets = [0, 128], sizes = [8, 128], strides = [1, 1]} : vector<8x384xf32> to vector<8x128xf32>
      %231 = arith.addf %229, %230 : vector<8x128xf32>
      %232 = arith.negf %231 : vector<8x128xf32>
      %233 = math.exp %232 : vector<8x128xf32>
      %cst_71 = arith.constant 1.000000e+00 : f32
      %234 = vector.broadcast %cst_71 : f32 to vector<8x128xf32>
      %235 = arith.addf %234, %233 : vector<8x128xf32>
      %236 = arith.divf %234, %235 : vector<8x128xf32>
      %237 = vector.extract_strided_slice %216 {offsets = [0, 256], sizes = [8, 128], strides = [1, 1]} : vector<8x384xf32> to vector<8x128xf32>
      %238 = vector.extract_strided_slice %220 {offsets = [0, 256], sizes = [8, 128], strides = [1, 1]} : vector<8x384xf32> to vector<8x128xf32>
      %239 = arith.mulf %228, %238 : vector<8x128xf32>
      %240 = arith.addf %237, %239 : vector<8x128xf32>
      %241 = math.tanh %240 : vector<8x128xf32>
      %cst_72 = arith.constant 1.000000e+00 : f32
      %242 = vector.broadcast %cst_72 : f32 to vector<8x128xf32>
      %243 = arith.subf %242, %236 : vector<8x128xf32>
      %244 = arith.mulf %243, %241 : vector<8x128xf32>
      %245 = arith.mulf %236, %208 : vector<8x128xf32>
      %246 = arith.addf %244, %245 : vector<8x128xf32>
      %247 = arith.truncf %246 : vector<8x128xf32> to vector<8x128xbf16>
      %248 = arith.index_cast %c5_i32 : i32 to index
      %c0_73 = arith.constant 0 : index
      %c0_74 = arith.constant 0 : index
      %249 = vector.load %arg12[%248, %c0_73, %c0_74] : memref<8x8x128xbf16, #tpu.memory_space<vmem>>, vector<1x8x128xbf16>
      %250 = vector.shape_cast %249 : vector<1x8x128xbf16> to vector<8x128xbf16>
      %251 = vector.shape_cast %247 : vector<8x128xbf16> to vector<1x8x128xbf16>
      tpu.vector_store %arg12[%248, %c0_73, %c0_74], %251 {strides = array<i32>} : memref<8x8x128xbf16, #tpu.memory_space<vmem>>, vector<1x8x128xbf16>,
      %c6_i32 = arith.constant 6 : i32
      %252 = arith.index_cast %c6_i32 : i32 to index
      %c0_75 = arith.constant 0 : index
      %c0_76 = arith.constant 0 : index
      %253 = vector.load %arg11[%252, %c0_75, %c0_76] : memref<8x8x384xf32, #tpu.memory_space<vmem>>, vector<1x8x384xf32>
      %254 = vector.shape_cast %253 : vector<1x8x384xf32> to vector<8x384xf32>
      %255 = arith.truncf %246 : vector<8x128xf32> to vector<8x128xbf16>
      %cst_77 = arith.constant dense<0.000000e+00> : vector<8x384xf32>
      %256 = tpu.matmul %255, %21, %cst_77 {dimension_numbers = #tpu.dot_dimension_numbers<[1], [0], [0], [1], [0, 0, 1, 1], [], []>} : vector<8x128xbf16>, vector<128x384xbf16>, vector<8x384xf32> -> vector<8x384xf32>
      %257 = vector.broadcast %22 : vector<1x384xf32> to vector<8x384xf32>
      %258 = arith.addf %256, %257 : vector<8x384xf32>
      %259 = vector.extract_strided_slice %254 {offsets = [0, 0], sizes = [8, 128], strides = [1, 1]} : vector<8x384xf32> to vector<8x128xf32>
      %260 = vector.extract_strided_slice %258 {offsets = [0, 0], sizes = [8, 128], strides = [1, 1]} : vector<8x384xf32> to vector<8x128xf32>
      %261 = arith.addf %259, %260 : vector<8x128xf32>
      %262 = arith.negf %261 : vector<8x128xf32>
      %263 = math.exp %262 : vector<8x128xf32>
      %cst_78 = arith.constant 1.000000e+00 : f32
      %264 = vector.broadcast %cst_78 : f32 to vector<8x128xf32>
      %265 = arith.addf %264, %263 : vector<8x128xf32>
      %266 = arith.divf %264, %265 : vector<8x128xf32>
      %267 = vector.extract_strided_slice %254 {offsets = [0, 128], sizes = [8, 128], strides = [1, 1]} : vector<8x384xf32> to vector<8x128xf32>
      %268 = vector.extract_strided_slice %258 {offsets = [0, 128], sizes = [8, 128], strides = [1, 1]} : vector<8x384xf32> to vector<8x128xf32>
      %269 = arith.addf %267, %268 : vector<8x128xf32>
      %270 = arith.negf %269 : vector<8x128xf32>
      %271 = math.exp %270 : vector<8x128xf32>
      %cst_79 = arith.constant 1.000000e+00 : f32
      %272 = vector.broadcast %cst_79 : f32 to vector<8x128xf32>
      %273 = arith.addf %272, %271 : vector<8x128xf32>
      %274 = arith.divf %272, %273 : vector<8x128xf32>
      %275 = vector.extract_strided_slice %254 {offsets = [0, 256], sizes = [8, 128], strides = [1, 1]} : vector<8x384xf32> to vector<8x128xf32>
      %276 = vector.extract_strided_slice %258 {offsets = [0, 256], sizes = [8, 128], strides = [1, 1]} : vector<8x384xf32> to vector<8x128xf32>
      %277 = arith.mulf %266, %276 : vector<8x128xf32>
      %278 = arith.addf %275, %277 : vector<8x128xf32>
      %279 = math.tanh %278 : vector<8x128xf32>
      %cst_80 = arith.constant 1.000000e+00 : f32
      %280 = vector.broadcast %cst_80 : f32 to vector<8x128xf32>
      %281 = arith.subf %280, %274 : vector<8x128xf32>
      %282 = arith.mulf %281, %279 : vector<8x128xf32>
      %283 = arith.mulf %274, %246 : vector<8x128xf32>
      %284 = arith.addf %282, %283 : vector<8x128xf32>
      %285 = arith.truncf %284 : vector<8x128xf32> to vector<8x128xbf16>
      %286 = arith.index_cast %c6_i32 : i32 to index
      %c0_81 = arith.constant 0 : index
      %c0_82 = arith.constant 0 : index
      %287 = vector.load %arg12[%286, %c0_81, %c0_82] : memref<8x8x128xbf16, #tpu.memory_space<vmem>>, vector<1x8x128xbf16>
      %288 = vector.shape_cast %287 : vector<1x8x128xbf16> to vector<8x128xbf16>
      %289 = vector.shape_cast %285 : vector<8x128xbf16> to vector<1x8x128xbf16>
      tpu.vector_store %arg12[%286, %c0_81, %c0_82], %289 {strides = array<i32>} : memref<8x8x128xbf16, #tpu.memory_space<vmem>>, vector<1x8x128xbf16>,
      %c7_i32 = arith.constant 7 : i32
      %290 = arith.index_cast %c7_i32 : i32 to index
      %c0_83 = arith.constant 0 : index
      %c0_84 = arith.constant 0 : index
      %291 = vector.load %arg11[%290, %c0_83, %c0_84] : memref<8x8x384xf32, #tpu.memory_space<vmem>>, vector<1x8x384xf32>
      %292 = vector.shape_cast %291 : vector<1x8x384xf32> to vector<8x384xf32>
      %293 = arith.truncf %284 : vector<8x128xf32> to vector<8x128xbf16>
      %cst_85 = arith.constant dense<0.000000e+00> : vector<8x384xf32>
      %294 = tpu.matmul %293, %21, %cst_85 {dimension_numbers = #tpu.dot_dimension_numbers<[1], [0], [0], [1], [0, 0, 1, 1], [], []>} : vector<8x128xbf16>, vector<128x384xbf16>, vector<8x384xf32> -> vector<8x384xf32>
      %295 = vector.broadcast %22 : vector<1x384xf32> to vector<8x384xf32>
      %296 = arith.addf %294, %295 : vector<8x384xf32>
      %297 = vector.extract_strided_slice %292 {offsets = [0, 0], sizes = [8, 128], strides = [1, 1]} : vector<8x384xf32> to vector<8x128xf32>
      %298 = vector.extract_strided_slice %296 {offsets = [0, 0], sizes = [8, 128], strides = [1, 1]} : vector<8x384xf32> to vector<8x128xf32>
      %299 = arith.addf %297, %298 : vector<8x128xf32>
      %300 = arith.negf %299 : vector<8x128xf32>
      %301 = math.exp %300 : vector<8x128xf32>
      %cst_86 = arith.constant 1.000000e+00 : f32
      %302 = vector.broadcast %cst_86 : f32 to vector<8x128xf32>
      %303 = arith.addf %302, %301 : vector<8x128xf32>
      %304 = arith.divf %302, %303 : vector<8x128xf32>
      %305 = vector.extract_strided_slice %292 {offsets = [0, 128], sizes = [8, 128], strides = [1, 1]} : vector<8x384xf32> to vector<8x128xf32>
      %306 = vector.extract_strided_slice %296 {offsets = [0, 128], sizes = [8, 128], strides = [1, 1]} : vector<8x384xf32> to vector<8x128xf32>
      %307 = arith.addf %305, %306 : vector<8x128xf32>
      %308 = arith.negf %307 : vector<8x128xf32>
      %309 = math.exp %308 : vector<8x128xf32>
      %cst_87 = arith.constant 1.000000e+00 : f32
      %310 = vector.broadcast %cst_87 : f32 to vector<8x128xf32>
      %311 = arith.addf %310, %309 : vector<8x128xf32>
      %312 = arith.divf %310, %311 : vector<8x128xf32>
      %313 = vector.extract_strided_slice %292 {offsets = [0, 256], sizes = [8, 128], strides = [1, 1]} : vector<8x384xf32> to vector<8x128xf32>
      %314 = vector.extract_strided_slice %296 {offsets = [0, 256], sizes = [8, 128], strides = [1, 1]} : vector<8x384xf32> to vector<8x128xf32>
      %315 = arith.mulf %304, %314 : vector<8x128xf32>
      %316 = arith.addf %313, %315 : vector<8x128xf32>
      %317 = math.tanh %316 : vector<8x128xf32>
      %cst_88 = arith.constant 1.000000e+00 : f32
      %318 = vector.broadcast %cst_88 : f32 to vector<8x128xf32>
      %319 = arith.subf %318, %312 : vector<8x128xf32>
      %320 = arith.mulf %319, %317 : vector<8x128xf32>
      %321 = arith.mulf %312, %284 : vector<8x128xf32>
      %322 = arith.addf %320, %321 : vector<8x128xf32>
      %323 = arith.truncf %322 : vector<8x128xf32> to vector<8x128xbf16>
      %324 = arith.index_cast %c7_i32 : i32 to index
      %c0_89 = arith.constant 0 : index
      %c0_90 = arith.constant 0 : index
      %325 = vector.load %arg12[%324, %c0_89, %c0_90] : memref<8x8x128xbf16, #tpu.memory_space<vmem>>, vector<1x8x128xbf16>
      %326 = vector.shape_cast %325 : vector<1x8x128xbf16> to vector<8x128xbf16>
      %327 = vector.shape_cast %323 : vector<8x128xbf16> to vector<1x8x128xbf16>
      tpu.vector_store %arg12[%324, %c0_89, %c0_90], %327 {strides = array<i32>} : memref<8x8x128xbf16, #tpu.memory_space<vmem>>, vector<1x8x128xbf16>,
      %c8_i32 = arith.constant 8 : i32
    } else {
    }
    %c0 = arith.constant 0 : index
    %c0_1 = arith.constant 0 : index
    %c0_2 = arith.constant 0 : index
    %3 = vector.load %arg12[%c0, %c0_1, %c0_2] : memref<8x8x128xbf16, #tpu.memory_space<vmem>>, vector<8x8x128xbf16>
    %4 = vector.shape_cast %3 : vector<8x8x128xbf16> to vector<64x128xbf16>
    %c0_3 = arith.constant 0 : index
    %c0_4 = arith.constant 0 : index
    %5 = vector.load %arg8[%c0_3, %c0_4] : memref<128x128xbf16, #tpu.memory_space<vmem>>, vector<128x128xbf16>
    %cst = arith.constant dense<0.000000e+00> : vector<64x128xf32>
    %6 = tpu.matmul %4, %5, %cst {dimension_numbers = #tpu.dot_dimension_numbers<[1], [0], [0], [1], [0, 0, 1, 1], [], []>} : vector<64x128xbf16>, vector<128x128xbf16>, vector<64x128xf32> -> vector<64x128xf32>
    %c0_5 = arith.constant 0 : index
    %c0_6 = arith.constant 0 : index
    %7 = vector.load %arg9[%c0_5, %c0_6] : memref<1x128xf32, #tpu.memory_space<vmem>>, vector<1x128xf32>
    %8 = vector.broadcast %7 : vector<1x128xf32> to vector<64x128xf32>
    %9 = arith.addf %6, %8 : vector<64x128xf32>
    %10 = vector.shape_cast %9 : vector<64x128xf32> to vector<8x8x128xf32>
    %c0_7 = arith.constant 0 : index
    %c0_8 = arith.constant 0 : index
    %c0_9 = arith.constant 0 : index
    %11 = vector.load %arg10[%c0_7, %c0_8, %c0_9] : memref<8x8x128xf32, #tpu.memory_space<vmem>>, vector<8x8x128xf32>
    tpu.vector_store %arg10[%c0_7, %c0_8, %c0_9], %10 {strides = array<i32>} : memref<8x8x128xf32, #tpu.memory_space<vmem>>, vector<8x8x128xf32>,
    return
  }
  func.func @transform_0(%arg0: i32, %arg1: i32) -> (i32, i32, i32) {
    %c0_i32 = arith.constant 0 : i32
    %c0_i32_0 = arith.constant 0 : i32
    %c0_i32_1 = arith.constant 0 : i32
    return %c0_i32, %arg0, %c0_i32_0 : i32, i32, i32
  }
  func.func @transform_1(%arg0: i32, %arg1: i32) -> (i32, i32, i32) {
    %c0_i32 = arith.constant 0 : i32
    %c0_i32_0 = arith.constant 0 : i32
    %c0_i32_1 = arith.constant 0 : i32
    return %c0_i32, %arg0, %c0_i32_0 : i32, i32, i32
  }
  func.func @transform_2(%arg0: i32, %arg1: i32) -> (i32, i32) {
    %c0_i32 = arith.constant 0 : i32
    %c0_i32_0 = arith.constant 0 : i32
    %c0_i32_1 = arith.constant 0 : i32
    return %c0_i32, %c0_i32_0 : i32, i32
  }
  func.func @transform_3(%arg0: i32, %arg1: i32) -> (i32, i32) {
    %c0_i32 = arith.constant 0 : i32
    %c0_i32_0 = arith.constant 0 : i32
    %c0_i32_1 = arith.constant 0 : i32
    return %c0_i32, %c0_i32_0 : i32, i32
  }
  func.func @transform_4(%arg0: i32, %arg1: i32) -> (i32, i32) {
    %c0_i32 = arith.constant 0 : i32
    %c0_i32_0 = arith.constant 0 : i32
    %c0_i32_1 = arith.constant 0 : i32
    return %c0_i32, %c0_i32_0 : i32, i32
  }
  func.func @transform_5(%arg0: i32, %arg1: i32) -> (i32, i32) {
    %c0_i32 = arith.constant 0 : i32
    %c0_i32_0 = arith.constant 0 : i32
    %c0_i32_1 = arith.constant 0 : i32
    return %c0_i32, %c0_i32_0 : i32, i32
  }
  func.func @transform_6(%arg0: i32, %arg1: i32) -> (i32, i32) {
    %c0_i32 = arith.constant 0 : i32
    %c0_i32_0 = arith.constant 0 : i32
    return %c0_i32, %arg1 : i32, i32
  }
  func.func @transform_7(%arg0: i32, %arg1: i32) -> (i32, i32) {
    %c0_i32 = arith.constant 0 : i32
    %c0_i32_0 = arith.constant 0 : i32
    return %c0_i32, %arg1 : i32, i32
  }
  func.func @transform_8(%arg0: i32, %arg1: i32) -> (i32, i32, i32) {
    %c0_i32 = arith.constant 0 : i32
    %c0_i32_0 = arith.constant 0 : i32
    return %c0_i32, %arg0, %arg1 : i32, i32, i32
  }
}

</mosaic_0001>

<llo_original>
// kernel: tpu_custom_call.1
$region0: #{tpu_custom_call.1}
  #allocation0 [shape = 'u32[]', space=smem, size = 0x4, offset = 0x4, fixed_abs, tag = 'smem constant byte address 0x4 - core index']
  #allocation1 [shape = 'u32[144,128]{1,0:T(1,128)}', space=vmem, size = 0x12000, scoped, tag = 'internal scratch']
  #allocation2 [shape = 'f32[8,8,384]{2,1,0:T(8,128)}', space=vmem, size = 0x18000, scoped, tag = 'scratch operand']
  #allocation3 [shape = 'bf16[8,8,128]{2,1,0:T(8,128)(2,1)}', space=vmem, size = 0x4000, scoped, tag = 'scratch operand']
  %s0 = inlined_call_operand.hbm [shape: bf16[8,8,128], index: 0, kind: input, shape index: {}]
  %s1 = inlined_call_operand.hbm [shape: bf16[8,8,128], index: 1, kind: input, shape index: {}]
  %s2 = inlined_call_operand.hbm [shape: bf16[128,384], index: 2, kind: input, shape index: {}]
  %s3 = inlined_call_operand.hbm [shape: bf16[128,384], index: 3, kind: input, shape index: {}]
  %s4 = inlined_call_operand.hbm [shape: f32[1,384], index: 4, kind: input, shape index: {}]
  %s5 = inlined_call_operand.hbm [shape: f32[1,384], index: 5, kind: input, shape index: {}]
  %s6 = inlined_call_operand.hbm [shape: bf16[128,128], index: 6, kind: input, shape index: {}]
  %s7 = inlined_call_operand.hbm [shape: f32[1,128], index: 7, kind: input, shape index: {}]
  %s8 = inlined_call_operand.hbm [shape: f32[8,8,128], index: 8, kind: output, shape index: {}]
  %s9 = sld [smem:[#allocation0]]
  $region78: #{tpu_custom_call.1} parent=0
    _
  %s11 = ssub.s32 1, %s9
  %s12 = scalar_select 0, %s11, %s9
  $region1: #{tpu_custom_call.1} parent=0
    #allocation4 [shape = 'u8[16384]{0}', space=vmem, size = 0x4000, scoped, tag = 'input window, operand 0, single buffered']
    #allocation5 [shape = 's32[1]{0}', space=sflag, size = 0x4, scoped, tag = 'scoped memory for tpu_custom_call.1']
    #allocation6 [shape = 's32[1]{0}', space=sflag, size = 0x4, scoped, tag = 'scoped memory for tpu_custom_call.1']
    #allocation7 [shape = 'u8[16384]{0}', space=vmem, size = 0x4000, scoped, tag = 'input window, operand 1, single buffered']
    #allocation8 [shape = 's32[1]{0}', space=sflag, size = 0x4, scoped, tag = 'scoped memory for tpu_custom_call.1']
    #allocation9 [shape = 'u8[98304]{0}', space=vmem, size = 0x18000, scoped, tag = 'input window, operand 2, single buffered']
    #allocation10 [shape = 'u8[98304]{0}', space=vmem, size = 0x18000, scoped, tag = 'input window, operand 3, single buffered']
    #allocation11 [shape = 's32[1]{0}', space=sflag, size = 0x4, scoped, tag = 'scoped memory for tpu_custom_call.1']
    #allocation12 [shape = 'u8[1536]{0}', space=vmem, size = 0x800, scoped, tag = 'input window, operand 4, single buffered']
    #allocation13 [shape = 'u8[1536]{0}', space=vmem, size = 0x800, scoped, tag = 'input window, operand 5, single buffered']
    #allocation14 [shape = 's32[1]{0}', space=sflag, size = 0x4, scoped, tag = 'scoped memory for tpu_custom_call.1']
    #allocation15 [shape = 'u8[32768]{0}', space=vmem, size = 0x8000, scoped, tag = 'input window, operand 6, single buffered']
    #allocation16 [shape = 'u8[512]{0}', space=vmem, size = 0x400, scoped, tag = 'input window, operand 7, single buffered']
    #allocation17 [shape = 's32[1]{0}', space=sflag, size = 0x4, scoped, tag = 'scoped memory for tpu_custom_call.1']
    #allocation18 [shape = 'u8[32768]{0}', space=vmem, size = 0x8000, scoped, tag = 'output window, operand 0, single buffered']
    %13 = vsyncpa [#allocation5], 0
    %14 = vsyncpa [#allocation8], 0
    %15 = vsyncpa [#allocation11], 0
    %16 = vsyncpa [#allocation14], 0
    %17 = vsyncpa [#allocation17], 0
    %18 = vsyncpa [#allocation6], 0
    // Predicated region
    $region2: #{tpu_custom_call.1} parent=1 // pred_check
      _
    $region3: #{tpu_custom_call.1} parent=1 // pred_check_branch
      %20 = sbr.rel (0) target = $region5
    $region4: #{tpu_custom_call.1} parent=1 // pred_region
      %s22 = ssub.s32 512, 512
      %23 = vsyncadd [#allocation5], %s22
      %s24 = sshll.u32 [#allocation4], 4
      %s25 = int_to_ptr.vmem [resolvable:$true] %s24
      %30 = dma.hbm_to_vmem [thread:$0]  %s0, 512, %s25, [#allocation5], 64, 64, 4
    $region5: #{tpu_custom_call.1} parent=1 // pred_fallthru
      _
    // Predicated region
    $region6: #{tpu_custom_call.1} parent=1 // pred_check
      _
    $region7: #{tpu_custom_call.1} parent=1 // pred_check_branch
      %32 = sbr.rel (0) target = $region9
    $region8: #{tpu_custom_call.1} parent=1 // pred_region
      %s34 = ssub.s32 512, 512
      %35 = vsyncadd [#allocation8], %s34
      %s36 = sshll.u32 [#allocation7], 4
      %s37 = int_to_ptr.vmem [resolvable:$true] %s36
      %42 = dma.hbm_to_vmem [thread:$0]  %s1, 512, %s37, [#allocation8], 64, 64, 4
    $region9: #{tpu_custom_call.1} parent=1 // pred_fallthru
      _
    // Predicated region
    $region10: #{tpu_custom_call.1} parent=1 // pred_check
      _
    $region11: #{tpu_custom_call.1} parent=1 // pred_check_branch
      %44 = sbr.rel (0) target = $region13
    $region12: #{tpu_custom_call.1} parent=1 // pred_region
      %s46 = ssub.s32 3072, 3072
      %47 = vsyncadd [#allocation8], %s46
      %s48 = sshll.u32 [#allocation9], 4
      %s49 = int_to_ptr.vmem [resolvable:$true] %s48
      %54 = dma.hbm_to_vmem [thread:$0]  %s2, 3072, %s49, [#allocation8], 192, 192, 12
    $region13: #{tpu_custom_call.1} parent=1 // pred_fallthru
      _
    // Predicated region
    $region14: #{tpu_custom_call.1} parent=1 // pred_check
      _
    $region15: #{tpu_custom_call.1} parent=1 // pred_check_branch
      %56 = sbr.rel (0) target = $region17
    $region16: #{tpu_custom_call.1} parent=1 // pred_region
      %s58 = ssub.s32 3072, 3072
      %59 = vsyncadd [#allocation11], %s58
      %s60 = sshll.u32 [#allocation10], 4
      %s61 = int_to_ptr.vmem [resolvable:$true] %s60
      %66 = dma.hbm_to_vmem [thread:$0]  %s3, 3072, %s61, [#allocation11], 192, 192, 12
    $region17: #{tpu_custom_call.1} parent=1 // pred_fallthru
      _
    // Predicated region
    $region18: #{tpu_custom_call.1} parent=1 // pred_check
      _
    $region19: #{tpu_custom_call.1} parent=1 // pred_check_branch
      %68 = sbr.rel (0) target = $region21
    $region20: #{tpu_custom_call.1} parent=1 // pred_region
      %s70 = ssub.s32 48, 48
      %71 = vsyncadd [#allocation11], %s70
      %s73 = sshll.u32 [#allocation12], 4
      %s74 = int_to_ptr.vmem [resolvable:$true] %s73
      %76 = dma.hbm_to_vmem [thread:$0]  %s4, 48, %s74, [#allocation11]
    $region21: #{tpu_custom_call.1} parent=1 // pred_fallthru
      _
    // Predicated region
    $region22: #{tpu_custom_call.1} parent=1 // pred_check
      _
    $region23: #{tpu_custom_call.1} parent=1 // pred_check_branch
      %78 = sbr.rel (0) target = $region25
    $region24: #{tpu_custom_call.1} parent=1 // pred_region
      %s80 = ssub.s32 48, 48
      %81 = vsyncadd [#allocation14], %s80
      %s83 = sshll.u32 [#allocation13], 4
      %s84 = int_to_ptr.vmem [resolvable:$true] %s83
      %86 = dma.hbm_to_vmem [thread:$0]  %s5, 48, %s84, [#allocation14]
    $region25: #{tpu_custom_call.1} parent=1 // pred_fallthru
      _
    // Predicated region
    $region26: #{tpu_custom_call.1} parent=1 // pred_check
      _
    $region27: #{tpu_custom_call.1} parent=1 // pred_check_branch
      %88 = sbr.rel (0) target = $region29
    $region28: #{tpu_custom_call.1} parent=1 // pred_region
      %s90 = ssub.s32 1024, 1024
      %91 = vsyncadd [#allocation14], %s90
      %s92 = sshll.u32 [#allocation15], 4
      %s93 = int_to_ptr.vmem [resolvable:$true] %s92
      %98 = dma.hbm_to_vmem [thread:$0]  %s6, 1024, %s93, [#allocation14], 64, 64, 4
    $region29: #{tpu_custom_call.1} parent=1 // pred_fallthru
      _
    // Predicated region
    $region30: #{tpu_custom_call.1} parent=1 // pred_check
      _
    $region31: #{tpu_custom_call.1} parent=1 // pred_check_branch
      %100 = sbr.rel (0) target = $region33
    $region32: #{tpu_custom_call.1} parent=1 // pred_region
      %s102 = ssub.s32 16, 16
      %103 = vsyncadd [#allocation17], %s102
      %s105 = sshll.u32 [#allocation16], 4
      %s106 = int_to_ptr.vmem [resolvable:$true] %s105
      %108 = dma.hbm_to_vmem [thread:$0]  %s7, 16, %s106, [#allocation17]
    $region33: #{tpu_custom_call.1} parent=1 // pred_fallthru
      _
    // Predicated region
    $region34: #{tpu_custom_call.1} parent=1 // pred_check
      _
    $region35: #{tpu_custom_call.1} parent=1 // pred_check_branch
      %110 = sbr.rel (0) target = $region37
    $region36: #{tpu_custom_call.1} parent=1 // pred_region
      %111 = dma.done [#allocation5], 512
    $region37: #{tpu_custom_call.1} parent=1 // pred_fallthru
      _
    // Predicated region
    $region38: #{tpu_custom_call.1} parent=1 // pred_check
      _
    $region39: #{tpu_custom_call.1} parent=1 // pred_check_branch
      %113 = sbr.rel (0) target = $region41
    $region40: #{tpu_custom_call.1} parent=1 // pred_region
      %114 = dma.done [#allocation8], 512
    $region41: #{tpu_custom_call.1} parent=1 // pred_fallthru
      _
    // Predicated region
    $region42: #{tpu_custom_call.1} parent=1 // pred_check
      _
    $region43: #{tpu_custom_call.1} parent=1 // pred_check_branch
      %116 = sbr.rel (0) target = $region45
    $region44: #{tpu_custom_call.1} parent=1 // pred_region
      %117 = dma.done [#allocation8], 3072
    $region45: #{tpu_custom_call.1} parent=1 // pred_fallthru
      _
    // Predicated region
    $region46: #{tpu_custom_call.1} parent=1 // pred_check
      _
    $region47: #{tpu_custom_call.1} parent=1 // pred_check_branch
      %119 = sbr.rel (0) target = $region49
    $region48: #{tpu_custom_call.1} parent=1 // pred_region
      %120 = dma.done [#allocation11], 3072
    $region49: #{tpu_custom_call.1} parent=1 // pred_fallthru
      _
    // Predicated region
    $region50: #{tpu_custom_call.1} parent=1 // pred_check
      _
    $region51: #{tpu_custom_call.1} parent=1 // pred_check_branch
      %122 = sbr.rel (0) target = $region53
    $region52: #{tpu_custom_call.1} parent=1 // pred_region
      %123 = dma.done [#allocation11], 48
    $region53: #{tpu_custom_call.1} parent=1 // pred_fallthru
      _
    // Predicated region
    $region54: #{tpu_custom_call.1} parent=1 // pred_check
      _
    $region55: #{tpu_custom_call.1} parent=1 // pred_check_branch
      %125 = sbr.rel (0) target = $region57
    $region56: #{tpu_custom_call.1} parent=1 // pred_region
      %126 = dma.done [#allocation14], 48
    $region57: #{tpu_custom_call.1} parent=1 // pred_fallthru
      _
    // Predicated region
    $region58: #{tpu_custom_call.1} parent=1 // pred_check
      _
    $region59: #{tpu_custom_call.1} parent=1 // pred_check_branch
      %128 = sbr.rel (0) target = $region61
    $region60: #{tpu_custom_call.1} parent=1 // pred_region
      %129 = dma.done [#allocation14], 1024
    $region61: #{tpu_custom_call.1} parent=1 // pred_fallthru
      _
    // Predicated region
    $region62: #{tpu_custom_call.1} parent=1 // pred_check
      _
    $region63: #{tpu_custom_call.1} parent=1 // pred_check_branch
      %131 = sbr.rel (0) target = $region65
    $region64: #{tpu_custom_call.1} parent=1 // pred_region
      %132 = dma.done [#allocation17], 16
    $region65: #{tpu_custom_call.1} parent=1 // pred_fallthru
      _
    %p134 = scmp.eq.s32.totalorder 0, 0
    // Predicated region
    $region66: #{tpu_custom_call.1} parent=1 // pred_check
      %p135 = pneg %p134
    $region67: #{tpu_custom_call.1} parent=1 // pred_check_branch
      %137 = sbr.rel (%p135) target = $region69
    $region68: #{tpu_custom_call.1} parent=1 // pred_region
      %v138 = vld [vmem:[#allocation4] sm:$0xf]
      %v139 = vld [vmem:[#allocation4 + $0x4] sm:$0xf]
      %v140 = vld [vmem:[#allocation4 + $0x8] sm:$0xf]
      %v141 = vld [vmem:[#allocation4 + $0xc] sm:$0xf]
      %v142 = vld [vmem:[#allocation4 + $0x10] sm:$0xf]
      %v143 = vld [vmem:[#allocation4 + $0x14] sm:$0xf]
      %v144 = vld [vmem:[#allocation4 + $0x18] sm:$0xf]
      %v145 = vld [vmem:[#allocation4 + $0x1c] sm:$0xf]
      %v146 = vld [vmem:[#allocation9] sm:$0xff]
      %v147 = vld [vmem:[#allocation9 + $0x8] sm:$0xf]
      %v148 = vld [vmem:[#allocation9 + $0xc] sm:$0xff]
      %v149 = vld [vmem:[#allocation9 + $0x14] sm:$0xf]
      %v150 = vld [vmem:[#allocation9 + $0x18] sm:$0xff]
      %v151 = vld [vmem:[#allocation9 + $0x20] sm:$0xf]
      %v152 = vld [vmem:[#allocation9 + $0x24] sm:$0xff]
      %v153 = vld [vmem:[#allocation9 + $0x2c] sm:$0xf]
      %v154 = vld [vmem:[#allocation9 + $0x30] sm:$0xff]
      %v155 = vld [vmem:[#allocation9 + $0x38] sm:$0xf]
      %v156 = vld [vmem:[#allocation9 + $0x3c] sm:$0xff]
      %v157 = vld [vmem:[#allocation9 + $0x44] sm:$0xf]
      %v158 = vld [vmem:[#allocation9 + $0x48] sm:$0xff]
      %v159 = vld [vmem:[#allocation9 + $0x50] sm:$0xf]
      %v160 = vld [vmem:[#allocation9 + $0x54] sm:$0xff]
      %v161 = vld [vmem:[#allocation9 + $0x5c] sm:$0xf]
      %v162 = vld [vmem:[#allocation9 + $0x60] sm:$0xff]
      %v163 = vld [vmem:[#allocation9 + $0x68] sm:$0xf]
      %v164 = vld [vmem:[#allocation9 + $0x6c] sm:$0xff]
      %v165 = vld [vmem:[#allocation9 + $0x74] sm:$0xf]
      %v166 = vld [vmem:[#allocation9 + $0x78] sm:$0xff]
      %v167 = vld [vmem:[#allocation9 + $0x80] sm:$0xf]
      %v168 = vld [vmem:[#allocation9 + $0x84] sm:$0xff]
      %v169 = vld [vmem:[#allocation9 + $0x8c] sm:$0xf]
      %v170 = vld [vmem:[#allocation9 + $0x90] sm:$0xff]
      %v171 = vld [vmem:[#allocation9 + $0x98] sm:$0xf]
      %v172 = vld [vmem:[#allocation9 + $0x9c] sm:$0xff]
      %v173 = vld [vmem:[#allocation9 + $0xa4] sm:$0xf]
      %v174 = vld [vmem:[#allocation9 + $0xa8] sm:$0xff]
      %v175 = vld [vmem:[#allocation9 + $0xb0] sm:$0xf]
      %v176 = vld [vmem:[#allocation9 + $0xb4] sm:$0xff]
      %v177 = vld [vmem:[#allocation9 + $0xbc] sm:$0xf]
      %v178 = vld [vmem:[#allocation12] sm:$0x7]
      %v180 = vlaneseq
      %v181 = vshrl.u32 %v180, 7
      %v182 = vsub.s32 0, %v181
      %v183 = vrot.slane %v178, %v182
      %v184 = vlaneseq
      %v185 = vshrl.u32 %v184, 7
      %v186 = vsub.s32 1, %v185
      %v187 = vrot.slane %v178, %v186
      %v188 = vlaneseq
      %v189 = vshrl.u32 %v188, 7
      %v190 = vsub.s32 2, %v189
      %v191 = vrot.slane %v178, %v190
      %v203 = vunpack.c.l.b16 %v138
      %v204 = vunpack.c.l.b16 %v139
      %v205 = vunpack.c.l.b16 %v140
      %v206 = vunpack.c.l.b16 %v141
      %v207 = vunpack.c.l.b16 %v142
      %v208 = vunpack.c.l.b16 %v143
      %v209 = vunpack.c.l.b16 %v144
      %v210 = vunpack.c.l.b16 %v145
      %v211 = vpack.c.b16 %v204, %v203
      %v212 = vpack.c.b16 %v206, %v205
      %v213 = vpack.c.b16 %v208, %v207
      %v214 = vpack.c.b16 %v210, %v209
      %v251 = vunpack.c.l.b16 %v146
      %v252 = vunpack.c.h.b16 %v146
      %v253 = vunpack.c.l.b16 %v147
      %v254 = vunpack.c.l.b16 %v148
      %v255 = vunpack.c.h.b16 %v148
      %v256 = vunpack.c.l.b16 %v149
      %v257 = vunpack.c.l.b16 %v150
      %v258 = vunpack.c.h.b16 %v150
      %v259 = vunpack.c.l.b16 %v151
      %v260 = vunpack.c.l.b16 %v152
      %v261 = vunpack.c.h.b16 %v152
      %v262 = vunpack.c.l.b16 %v153
      %v263 = vunpack.c.l.b16 %v154
      %v264 = vunpack.c.h.b16 %v154
      %v265 = vunpack.c.l.b16 %v155
      %v266 = vunpack.c.l.b16 %v156
      %v267 = vunpack.c.h.b16 %v156
      %v268 = vunpack.c.l.b16 %v157
      %v269 = vunpack.c.l.b16 %v158
      %v270 = vunpack.c.h.b16 %v158
      %v271 = vunpack.c.l.b16 %v159
      %v272 = vunpack.c.l.b16 %v160
      %v273 = vunpack.c.h.b16 %v160
      %v274 = vunpack.c.l.b16 %v161
      %v275 = vunpack.c.l.b16 %v162
      %v276 = vunpack.c.h.b16 %v162
      %v277 = vunpack.c.l.b16 %v163
      %v278 = vunpack.c.l.b16 %v164
      %v279 = vunpack.c.h.b16 %v164
      %v280 = vunpack.c.l.b16 %v165
      %v281 = vunpack.c.l.b16 %v166
      %v282 = vunpack.c.h.b16 %v166
      %v283 = vunpack.c.l.b16 %v167
      %v284 = vunpack.c.l.b16 %v168
      %v285 = vunpack.c.h.b16 %v168
      %v286 = vunpack.c.l.b16 %v169
      %v287 = vunpack.c.l.b16 %v170
      %v288 = vunpack.c.h.b16 %v170
      %v289 = vunpack.c.l.b16 %v171
      %v290 = vunpack.c.l.b16 %v172
      %v291 = vunpack.c.h.b16 %v172
      %v292 = vunpack.c.l.b16 %v173
      %v293 = vunpack.c.l.b16 %v174
      %v294 = vunpack.c.h.b16 %v174
      %v295 = vunpack.c.l.b16 %v175
      %v296 = vunpack.c.l.b16 %v176
      %v297 = vunpack.c.h.b16 %v176
      %v298 = vunpack.c.l.b16 %v177
      %v299 = vpack.c.b16 %v254, %v251
      %v300 = vpack.c.b16 %v255, %v252
      %v301 = vpack.c.b16 %v256, %v253
      %v302 = vpack.c.b16 %v260, %v257
      %v303 = vpack.c.b16 %v261, %v258
      %v304 = vpack.c.b16 %v262, %v259
      %v305 = vpack.c.b16 %v266, %v263
      %v306 = vpack.c.b16 %v267, %v264
      %v307 = vpack.c.b16 %v268, %v265
      %v308 = vpack.c.b16 %v272, %v269
      %v309 = vpack.c.b16 %v273, %v270
      %v310 = vpack.c.b16 %v274, %v271
      %v311 = vpack.c.b16 %v278, %v275
      %v312 = vpack.c.b16 %v279, %v276
      %v313 = vpack.c.b16 %v280, %v277
      %v314 = vpack.c.b16 %v284, %v281
      %v315 = vpack.c.b16 %v285, %v282
      %v316 = vpack.c.b16 %v286, %v283
      %v317 = vpack.c.b16 %v290, %v287
      %v318 = vpack.c.b16 %v291, %v288
      %v319 = vpack.c.b16 %v292, %v289
      %v320 = vpack.c.b16 %v296, %v293
      %v321 = vpack.c.b16 %v297, %v294
      %v322 = vpack.c.b16 %v298, %v295
      %347 = vmatprep.subr.bf16.mxu0 %v300
      %348 = vmatpush1.bf16.msra.mxu0 %v299
      %349 = vmatprep.subr.bf16.mxu0 %v303
      %350 = vmatpush1.bf16.msra.mxu0 %v302
      %351 = vmatprep.subr.bf16.mxu0 %v306
      %352 = vmatpush1.bf16.msra.mxu0 %v305
      %353 = vmatprep.subr.bf16.mxu0 %v309
      %354 = vmatpush1.bf16.msra.mxu0 %v308
      %355 = vmatprep.subr.bf16.mxu0 %v312
      %356 = vmatpush1.bf16.msra.mxu0 %v311
      %357 = vmatprep.subr.bf16.mxu0 %v315
      %358 = vmatpush1.bf16.msra.mxu0 %v314
      %359 = vmatprep.subr.bf16.mxu0 %v318
      %360 = vmatpush1.bf16.msra.mxu0 %v317
      %361 = vmatprep.subr.bf16.mxu0 %v321
      %362 = vmatpush1.bf16.msra.mxu0 %v320
      %363 = vmatprep.subr.bf16.mxu0 0
      %364 = vmatpush1.bf16.msra.mxu0 0
      %365 = vmatprep.subr.bf16.mxu0 0
      %366 = vmatpush1.bf16.msra.mxu0 0
      %367 = vmatprep.subr.bf16.mxu0 0
      %368 = vmatpush1.bf16.msra.mxu0 0
      %369 = vmatprep.subr.bf16.mxu0 0
      %370 = vmatpush1.bf16.msra.mxu0 0
      %371 = vmatprep.subr.bf16.mxu0 0
      %372 = vmatpush1.bf16.msra.mxu0 0
      %373 = vmatprep.subr.bf16.mxu0 0
      %374 = vmatpush1.bf16.msra.mxu0 0
      %375 = vmatprep.subr.bf16.mxu0 0
      %376 = vmatpush1.bf16.msra.mxu0 0
      %377 = vmatprep.subr.bf16.mxu0 0
      %378 = vmatpush1.bf16.msra.mxu0 0
      %379 = vmatprep.mubr.bf16.mxu0 0
      %380 = vmatmul.mubr.bf16.gmra.mrb[0].mxu0 %v211
      %v381 = vpop.f32.mrb[0].mxu0
      %v382 = vadd.f32 %v183, %v381
      %v383 = vpop.f32.mrb[0].mxu0
      %v384 = vadd.f32 %v187, %v383
      %v385 = vpop.f32.mrb[0].mxu0
      %v386 = vadd.f32 %v183, %v385
      %v387 = vpop.f32.mrb[0].mxu0
      %v388 = vadd.f32 %v187, %v387
      %389 = vmatprep.mubr.bf16.mxu0 0
      %390 = vmatmul.mubr.bf16.gmra.mrb[0].mxu0 %v212
      %v391 = vpop.f32.mrb[0].mxu0
      %v392 = vadd.f32 %v183, %v391
      %v393 = vpop.f32.mrb[0].mxu0
      %v394 = vadd.f32 %v187, %v393
      %v395 = vpop.f32.mrb[0].mxu0
      %v396 = vadd.f32 %v183, %v395
      %v397 = vpop.f32.mrb[0].mxu0
      %v398 = vadd.f32 %v187, %v397
      %399 = vmatprep.mubr.bf16.mxu0 0
      %400 = vmatmul.mubr.bf16.gmra.mrb[0].mxu0 %v213
      %v401 = vpop.f32.mrb[0].mxu0
      %v402 = vadd.f32 %v183, %v401
      %v403 = vpop.f32.mrb[0].mxu0
      %v404 = vadd.f32 %v187, %v403
      %v405 = vpop.f32.mrb[0].mxu0
      %v406 = vadd.f32 %v183, %v405
      %v407 = vpop.f32.mrb[0].mxu0
      %v408 = vadd.f32 %v187, %v407
      %409 = vmatprep.mubr.bf16.mxu0 0
      %410 = vmatmul.mubr.bf16.gmra.mrb[0].mxu0 %v214
      %v411 = vpop.f32.mrb[0].mxu0
      %v412 = vadd.f32 %v183, %v411
      %v413 = vpop.f32.mrb[0].mxu0
      %v414 = vadd.f32 %v187, %v413
      %v415 = vpop.f32.mrb[0].mxu0
      %v416 = vadd.f32 %v183, %v415
      %v417 = vpop.f32.mrb[0].mxu0
      %v418 = vadd.f32 %v187, %v417
      %419 = vdwg.mxu0
      %420 = vmatprep.subr.bf16.mxu0 0
      %421 = vmatpush1.bf16.msra.mxu0 %v301
      %422 = vmatprep.subr.bf16.mxu0 0
      %423 = vmatpush1.bf16.msra.mxu0 %v304
      %424 = vmatprep.subr.bf16.mxu0 0
      %425 = vmatpush1.bf16.msra.mxu0 %v307
      %426 = vmatprep.subr.bf16.mxu0 0
      %427 = vmatpush1.bf16.msra.mxu0 %v310
      %428 = vmatprep.subr.bf16.mxu0 0
      %429 = vmatpush1.bf16.msra.mxu0 %v313
      %430 = vmatprep.subr.bf16.mxu0 0
      %431 = vmatpush1.bf16.msra.mxu0 %v316
      %432 = vmatprep.subr.bf16.mxu0 0
      %433 = vmatpush1.bf16.msra.mxu0 %v319
      %434 = vmatprep.subr.bf16.mxu0 0
      %435 = vmatpush1.bf16.msra.mxu0 %v322
      %436 = vmatprep.subr.bf16.mxu0 0
      %437 = vmatpush1.bf16.msra.mxu0 0
      %438 = vmatprep.subr.bf16.mxu0 0
      %439 = vmatpush1.bf16.msra.mxu0 0
      %440 = vmatprep.subr.bf16.mxu0 0
      %441 = vmatpush1.bf16.msra.mxu0 0
      %442 = vmatprep.subr.bf16.mxu0 0
      %443 = vmatpush1.bf16.msra.mxu0 0
      %444 = vmatprep.subr.bf16.mxu0 0
      %445 = vmatpush1.bf16.msra.mxu0 0
      %446 = vmatprep.subr.bf16.mxu0 0
      %447 = vmatpush1.bf16.msra.mxu0 0
      %448 = vmatprep.subr.bf16.mxu0 0
      %449 = vmatpush1.bf16.msra.mxu0 0
      %450 = vmatprep.subr.bf16.mxu0 0
      %451 = vmatpush1.bf16.msra.mxu0 0
      %452 = vmatprep.mubr.bf16.mxu0 0
      %453 = vmatmul.mubr.bf16.gmra.mrb[0].mxu0 %v211
      %v454 = vpop.f32.mrb[0].mxu0
      %v455 = vadd.f32 %v191, %v454
      %v456 = vpop.f32.mrb[0].mxu0
      %v457 = vpop.f32.mrb[0].mxu0
      %v458 = vadd.f32 %v191, %v457
      %v459 = vpop.f32.mrb[0].mxu0
      %460 = vmatprep.mubr.bf16.mxu0 0
      %461 = vmatmul.mubr.bf16.gmra.mrb[0].mxu0 %v212
      %v462 = vpop.f32.mrb[0].mxu0
      %v463 = vadd.f32 %v191, %v462
      %v464 = vpop.f32.mrb[0].mxu0
      %v465 = vpop.f32.mrb[0].mxu0
      %v466 = vadd.f32 %v191, %v465
      %v467 = vpop.f32.mrb[0].mxu0
      %468 = vmatprep.mubr.bf16.mxu0 0
      %469 = vmatmul.mubr.bf16.gmra.mrb[0].mxu0 %v213
      %v470 = vpop.f32.mrb[0].mxu0
      %v471 = vadd.f32 %v191, %v470
      %v472 = vpop.f32.mrb[0].mxu0
      %v473 = vpop.f32.mrb[0].mxu0
      %v474 = vadd.f32 %v191, %v473
      %v475 = vpop.f32.mrb[0].mxu0
      %476 = vmatprep.mubr.bf16.mxu0 0
      %477 = vmatmul.mubr.bf16.gmra.mrb[0].mxu0 %v214
      %v478 = vpop.f32.mrb[0].mxu0
      %v479 = vadd.f32 %v191, %v478
      %v480 = vpop.f32.mrb[0].mxu0
      %v481 = vpop.f32.mrb[0].mxu0
      %v482 = vadd.f32 %v191, %v481
      %v483 = vpop.f32.mrb[0].mxu0
      %484 = vdwg.mxu0
      %485 = vst [vmem:[#allocation2] sm:$0xff] %v382
      %486 = vst [vmem:[#allocation2 + $0x8] sm:$0xff] %v384
      %487 = vst [vmem:[#allocation2 + $0x10] sm:$0xff] %v455
      %488 = vst [vmem:[#allocation2 + $0x18] sm:$0xff] %v386
      %489 = vst [vmem:[#allocation2 + $0x20] sm:$0xff] %v388
      %490 = vst [vmem:[#allocation2 + $0x28] sm:$0xff] %v458
      %491 = vst [vmem:[#allocation2 + $0x30] sm:$0xff] %v392
      %492 = vst [vmem:[#allocation2 + $0x38] sm:$0xff] %v394
      %493 = vst [vmem:[#allocation2 + $0x40] sm:$0xff] %v463
      %494 = vst [vmem:[#allocation2 + $0x48] sm:$0xff] %v396
      %495 = vst [vmem:[#allocation2 + $0x50] sm:$0xff] %v398
      %496 = vst [vmem:[#allocation2 + $0x58] sm:$0xff] %v466
      %497 = vst [vmem:[#allocation2 + $0x60] sm:$0xff] %v402
      %498 = vst [vmem:[#allocation2 + $0x68] sm:$0xff] %v404
      %499 = vst [vmem:[#allocation2 + $0x70] sm:$0xff] %v471
      %500 = vst [vmem:[#allocation2 + $0x78] sm:$0xff] %v406
      %501 = vst [vmem:[#allocation2 + $0x80] sm:$0xff] %v408
      %502 = vst [vmem:[#allocation2 + $0x88] sm:$0xff] %v474
      %503 = vst [vmem:[#allocation2 + $0x90] sm:$0xff] %v412
      %504 = vst [vmem:[#allocation2 + $0x98] sm:$0xff] %v414
      %505 = vst [vmem:[#allocation2 + $0xa0] sm:$0xff] %v479
      %506 = vst [vmem:[#allocation2 + $0xa8] sm:$0xff] %v416
      %507 = vst [vmem:[#allocation2 + $0xb0] sm:$0xff] %v418
      %508 = vst [vmem:[#allocation2 + $0xb8] sm:$0xff] %v482
      %v509 = vld [vmem:[#allocation10] sm:$0xff]
      %v510 = vld [vmem:[#allocation10 + $0x8] sm:$0xf]
      %v511 = vld [vmem:[#allocation10 + $0xc] sm:$0xff]
      %v512 = vld [vmem:[#allocation10 + $0x14] sm:$0xf]
      %v513 = vld [vmem:[#allocation10 + $0x18] sm:$0xff]
      %v514 = vld [vmem:[#allocation10 + $0x20] sm:$0xf]
      %v515 = vld [vmem:[#allocation10 + $0x24] sm:$0xff]
      %v516 = vld [vmem:[#allocation10 + $0x2c] sm:$0xf]
      %v517 = vld [vmem:[#allocation10 + $0x30] sm:$0xff]
      %v518 = vld [vmem:[#allocation10 + $0x38] sm:$0xf]
      %v519 = vld [vmem:[#allocation10 + $0x3c] sm:$0xff]
      %v520 = vld [vmem:[#allocation10 + $0x44] sm:$0xf]
      %v521 = vld [vmem:[#allocation10 + $0x48] sm:$0xff]
      %v522 = vld [vmem:[#allocation10 + $0x50] sm:$0xf]
      %v523 = vld [vmem:[#allocation10 + $0x54] sm:$0xff]
      %v524 = vld [vmem:[#allocation10 + $0x5c] sm:$0xf]
      %v525 = vld [vmem:[#allocation10 + $0x60] sm:$0xff]
      %v526 = vld [vmem:[#allocation10 + $0x68] sm:$0xf]
      %v527 = vld [vmem:[#allocation10 + $0x6c] sm:$0xff]
      %v528 = vld [vmem:[#allocation10 + $0x74] sm:$0xf]
      %v529 = vld [vmem:[#allocation10 + $0x78] sm:$0xff]
      %v530 = vld [vmem:[#allocation10 + $0x80] sm:$0xf]
      %v531 = vld [vmem:[#allocation10 + $0x84] sm:$0xff]
      %v532 = vld [vmem:[#allocation10 + $0x8c] sm:$0xf]
      %v533 = vld [vmem:[#allocation10 + $0x90] sm:$0xff]
      %v534 = vld [vmem:[#allocation10 + $0x98] sm:$0xf]
      %v535 = vld [vmem:[#allocation10 + $0x9c] sm:$0xff]
      %v536 = vld [vmem:[#allocation10 + $0xa4] sm:$0xf]
      %v537 = vld [vmem:[#allocation10 + $0xa8] sm:$0xff]
      %v538 = vld [vmem:[#allocation10 + $0xb0] sm:$0xf]
      %v539 = vld [vmem:[#allocation10 + $0xb4] sm:$0xff]
      %v540 = vld [vmem:[#allocation10 + $0xbc] sm:$0xf]
      %v541 = vld [vmem:[#allocation13] sm:$0x7]
      %v542 = vld [vmem:[#allocation2] sm:$0xff]
      %v543 = vld [vmem:[#allocation2 + $0x8] sm:$0xff]
      %v544 = vld [vmem:[#allocation2 + $0x10] sm:$0xff]
      %v546 = vlaneseq
      %v547 = vshrl.u32 %v546, 7
      %v548 = vsub.s32 0, %v547
      %v549 = vrot.slane %v541, %v548
      %v550 = vlaneseq
      %v551 = vshrl.u32 %v550, 7
      %v552 = vsub.s32 1, %v551
      %v553 = vrot.slane %v541, %v552
      %v554 = vlaneseq
      %v555 = vshrl.u32 %v554, 7
      %v556 = vsub.s32 2, %v555
      %v557 = vrot.slane %v541, %v556
      %v593 = vunpack.c.l.b16 %v509
      %v594 = vunpack.c.h.b16 %v509
      %v595 = vunpack.c.l.b16 %v510
      %v596 = vunpack.c.l.b16 %v511
      %v597 = vunpack.c.h.b16 %v511
      %v598 = vunpack.c.l.b16 %v512
      %v599 = vunpack.c.l.b16 %v513
      %v600 = vunpack.c.h.b16 %v513
      %v601 = vunpack.c.l.b16 %v514
      %v602 = vunpack.c.l.b16 %v515
      %v603 = vunpack.c.h.b16 %v515
      %v604 = vunpack.c.l.b16 %v516
      %v605 = vunpack.c.l.b16 %v517
      %v606 = vunpack.c.h.b16 %v517
      %v607 = vunpack.c.l.b16 %v518
      %v608 = vunpack.c.l.b16 %v519
      %v609 = vunpack.c.h.b16 %v519
      %v610 = vunpack.c.l.b16 %v520
      %v611 = vunpack.c.l.b16 %v521
      %v612 = vunpack.c.h.b16 %v521
      %v613 = vunpack.c.l.b16 %v522
      %v614 = vunpack.c.l.b16 %v523
      %v615 = vunpack.c.h.b16 %v523
      %v616 = vunpack.c.l.b16 %v524
      %v617 = vunpack.c.l.b16 %v525
      %v618 = vunpack.c.h.b16 %v525
      %v619 = vunpack.c.l.b16 %v526
      %v620 = vunpack.c.l.b16 %v527
      %v621 = vunpack.c.h.b16 %v527
      %v622 = vunpack.c.l.b16 %v528
      %v623 = vunpack.c.l.b16 %v529
      %v624 = vunpack.c.h.b16 %v529
      %v625 = vunpack.c.l.b16 %v530
      %v626 = vunpack.c.l.b16 %v531
      %v627 = vunpack.c.h.b16 %v531
      %v628 = vunpack.c.l.b16 %v532
      %v629 = vunpack.c.l.b16 %v533
      %v630 = vunpack.c.h.b16 %v533
      %v631 = vunpack.c.l.b16 %v534
      %v632 = vunpack.c.l.b16 %v535
      %v633 = vunpack.c.h.b16 %v535
      %v634 = vunpack.c.l.b16 %v536
      %v635 = vunpack.c.l.b16 %v537
      %v636 = vunpack.c.h.b16 %v537
      %v637 = vunpack.c.l.b16 %v538
      %v638 = vunpack.c.l.b16 %v539
      %v639 = vunpack.c.h.b16 %v539
      %v640 = vunpack.c.l.b16 %v540
      %v641 = vpack.c.b16 %v596, %v593
      %v642 = vpack.c.b16 %v597, %v594
      %v643 = vpack.c.b16 %v598, %v595
      %v644 = vpack.c.b16 %v602, %v599
      %v645 = vpack.c.b16 %v603, %v600
      %v646 = vpack.c.b16 %v604, %v601
      %v647 = vpack.c.b16 %v608, %v605
      %v648 = vpack.c.b16 %v609, %v606
      %v649 = vpack.c.b16 %v610, %v607
      %v650 = vpack.c.b16 %v614, %v611
      %v651 = vpack.c.b16 %v615, %v612
      %v652 = vpack.c.b16 %v616, %v613
      %v653 = vpack.c.b16 %v620, %v617
      %v654 = vpack.c.b16 %v621, %v618
      %v655 = vpack.c.b16 %v622, %v619
      %v656 = vpack.c.b16 %v626, %v623
      %v657 = vpack.c.b16 %v627, %v624
      %v658 = vpack.c.b16 %v628, %v625
      %v659 = vpack.c.b16 %v632, %v629
      %v660 = vpack.c.b16 %v633, %v630
      %v661 = vpack.c.b16 %v634, %v631
      %v662 = vpack.c.b16 %v638, %v635
      %v663 = vpack.c.b16 %v639, %v636
      %v664 = vpack.c.b16 %v640, %v637
      %689 = vmatprep.subr.bf16.mxu0 %v642
      %690 = vmatpush1.bf16.msra.mxu0 %v641
      %691 = vmatprep.subr.bf16.mxu0 %v645
      %692 = vmatpush1.bf16.msra.mxu0 %v644
      %693 = vmatprep.subr.bf16.mxu0 %v648
      %694 = vmatpush1.bf16.msra.mxu0 %v647
      %695 = vmatprep.subr.bf16.mxu0 %v651
      %696 = vmatpush1.bf16.msra.mxu0 %v650
      %697 = vmatprep.subr.bf16.mxu0 %v654
      %698 = vmatpush1.bf16.msra.mxu0 %v653
      %699 = vmatprep.subr.bf16.mxu0 %v657
      %700 = vmatpush1.bf16.msra.mxu0 %v656
      %701 = vmatprep.subr.bf16.mxu0 %v660
      %702 = vmatpush1.bf16.msra.mxu0 %v659
      %703 = vmatprep.subr.bf16.mxu0 %v663
      %704 = vmatpush1.bf16.msra.mxu0 %v662
      %705 = vmatprep.subr.bf16.mxu0 0
      %706 = vmatpush1.bf16.msra.mxu0 0
      %707 = vmatprep.subr.bf16.mxu0 0
      %708 = vmatpush1.bf16.msra.mxu0 0
      %709 = vmatprep.subr.bf16.mxu0 0
      %710 = vmatpush1.bf16.msra.mxu0 0
      %711 = vmatprep.subr.bf16.mxu0 0
      %712 = vmatpush1.bf16.msra.mxu0 0
      %713 = vmatprep.subr.bf16.mxu0 0
      %714 = vmatpush1.bf16.msra.mxu0 0
      %715 = vmatprep.subr.bf16.mxu0 0
      %716 = vmatpush1.bf16.msra.mxu0 0
      %717 = vmatprep.subr.bf16.mxu0 0
      %718 = vmatpush1.bf16.msra.mxu0 0
      %719 = vmatprep.subr.bf16.mxu0 0
      %720 = vmatpush1.bf16.msra.mxu0 0
      %721 = vmatprep.mubr.bf16.mxu0 0
      %722 = vmatmul.mubr.bf16.gmra.mrb[0].mxu0 0
      %v723 = vpop.f32.mrb[0].mxu0
      %v724 = vadd.f32 %v549, %v723
      %v725 = vpop.f32.mrb[0].mxu0
      %v726 = vadd.f32 %v553, %v725
      %v727 = vpop.f32.mrb[0].mxu0
      %v728 = vpop.f32.mrb[0].mxu0
      %729 = vdwg.mxu0
      %730 = vmatprep.subr.bf16.mxu0 0
      %731 = vmatpush1.bf16.msra.mxu0 %v643
      %732 = vmatprep.subr.bf16.mxu0 0
      %733 = vmatpush1.bf16.msra.mxu0 %v646
      %734 = vmatprep.subr.bf16.mxu0 0
      %735 = vmatpush1.bf16.msra.mxu0 %v649
      %736 = vmatprep.subr.bf16.mxu0 0
      %737 = vmatpush1.bf16.msra.mxu0 %v652
      %738 = vmatprep.subr.bf16.mxu0 0
      %739 = vmatpush1.bf16.msra.mxu0 %v655
      %740 = vmatprep.subr.bf16.mxu0 0
      %741 = vmatpush1.bf16.msra.mxu0 %v658
      %742 = vmatprep.subr.bf16.mxu0 0
      %743 = vmatpush1.bf16.msra.mxu0 %v661
      %744 = vmatprep.subr.bf16.mxu0 0
      %745 = vmatpush1.bf16.msra.mxu0 %v664
      %746 = vmatprep.subr.bf16.mxu0 0
      %747 = vmatpush1.bf16.msra.mxu0 0
      %748 = vmatprep.subr.bf16.mxu0 0
      %749 = vmatpush1.bf16.msra.mxu0 0
      %750 = vmatprep.subr.bf16.mxu0 0
      %751 = vmatpush1.bf16.msra.mxu0 0
      %752 = vmatprep.subr.bf16.mxu0 0
      %753 = vmatpush1.bf16.msra.mxu0 0
      %754 = vmatprep.subr.bf16.mxu0 0
      %755 = vmatpush1.bf16.msra.mxu0 0
      %756 = vmatprep.subr.bf16.mxu0 0
      %757 = vmatpush1.bf16.msra.mxu0 0
      %758 = vmatprep.subr.bf16.mxu0 0
      %759 = vmatpush1.bf16.msra.mxu0 0
      %760 = vmatprep.subr.bf16.mxu0 0
      %761 = vmatpush1.bf16.msra.mxu0 0
      %762 = vmatprep.mubr.bf16.mxu0 0
      %763 = vmatmul.mubr.bf16.gmra.mrb[0].mxu0 0
      %v764 = vpop.f32.mrb[0].mxu0
      %v765 = vadd.f32 %v557, %v764
      %v766 = vpop.f32.mrb[0].mxu0
      %v767 = vpop.f32.mrb[0].mxu0
      %v768 = vpop.f32.mrb[0].mxu0
      %769 = vdwg.mxu0
      %v770 = vadd.f32 %v542, %v724
      %v771 = vxor.u32 %v770, 2147483648
      %v772 = vmul.f32 %v771, 1.442695
      %v773 = vpow.pop %v772
      %v774 = vadd.f32 %v773, 1.0
      %v775 = vrcp.pop %v774
      %v776 = vmul.f32 1.0, %v775
      %v777 = vadd.f32 %v543, %v726
      %v778 = vxor.u32 %v777, 2147483648
      %v779 = vmul.f32 %v778, 1.442695
      %v780 = vpow.pop %v779
      %v781 = vadd.f32 %v780, 1.0
      %v782 = vrcp.pop %v781
      %v783 = vmul.f32 1.0, %v782
      %v784 = vmul.f32 %v776, %v765
      %v785 = vadd.f32 %v544, %v784
      %v786 = vtanh.pop %v785
      %v787 = vsub.f32 1.0, %v783
      %v788 = vmul.f32 %v787, %v786
      %v789 = vmul.f32 %v783, 0.0
      %v790 = vadd.f32 %v788, %v789
      %v791 = vpack.c.bf16 %v790, %v790
      %792 = vst [vmem:[#allocation3] sm:$0xf] %v791
      %s793 = scalar_lea.vmem [#allocation2], 24
      %v794 = vld [vmem:[%s793] sm:$0xff]
      %v795 = vld [vmem:[%s793 + $0x8] sm:$0xff]
      %v796 = vld [vmem:[%s793 + $0x10] sm:$0xff]
      %797 = vmatprep.subr.bf16.mxu0 %v642
      %798 = vmatpush1.bf16.msra.mxu0 %v641
      %799 = vmatprep.subr.bf16.mxu0 %v645
      %800 = vmatpush1.bf16.msra.mxu0 %v644
      %801 = vmatprep.subr.bf16.mxu0 %v648
      %802 = vmatpush1.bf16.msra.mxu0 %v647
      %803 = vmatprep.subr.bf16.mxu0 %v651
      %804 = vmatpush1.bf16.msra.mxu0 %v650
      %805 = vmatprep.subr.bf16.mxu0 %v654
      %806 = vmatpush1.bf16.msra.mxu0 %v653
      %807 = vmatprep.subr.bf16.mxu0 %v657
      %808 = vmatpush1.bf16.msra.mxu0 %v656
      %809 = vmatprep.subr.bf16.mxu0 %v660
      %810 = vmatpush1.bf16.msra.mxu0 %v659
      %811 = vmatprep.subr.bf16.mxu0 %v663
      %812 = vmatpush1.bf16.msra.mxu0 %v662
      %813 = vmatprep.subr.bf16.mxu0 0
      %814 = vmatpush1.bf16.msra.mxu0 0
      %815 = vmatprep.subr.bf16.mxu0 0
      %816 = vmatpush1.bf16.msra.mxu0 0
      %817 = vmatprep.subr.bf16.mxu0 0
      %818 = vmatpush1.bf16.msra.mxu0 0
      %819 = vmatprep.subr.bf16.mxu0 0
      %820 = vmatpush1.bf16.msra.mxu0 0
      %821 = vmatprep.subr.bf16.mxu0 0
      %822 = vmatpush1.bf16.msra.mxu0 0
      %823 = vmatprep.subr.bf16.mxu0 0
      %824 = vmatpush1.bf16.msra.mxu0 0
      %825 = vmatprep.subr.bf16.mxu0 0
      %826 = vmatpush1.bf16.msra.mxu0 0
      %827 = vmatprep.subr.bf16.mxu0 0
      %828 = vmatpush1.bf16.msra.mxu0 0
      %829 = vmatprep.mubr.bf16.mxu0 0
      %830 = vmatmul.mubr.bf16.gmra.mrb[0].mxu0 %v791
      %v831 = vpop.f32.mrb[0].mxu0
      %v832 = vadd.f32 %v549, %v831
      %v833 = vpop.f32.mrb[0].mxu0
      %v834 = vadd.f32 %v553, %v833
      %v835 = vpop.f32.mrb[0].mxu0
      %v836 = vpop.f32.mrb[0].mxu0
      %837 = vdwg.mxu0
      %838 = vmatprep.subr.bf16.mxu0 0
      %839 = vmatpush1.bf16.msra.mxu0 %v643
      %840 = vmatprep.subr.bf16.mxu0 0
      %841 = vmatpush1.bf16.msra.mxu0 %v646
      %842 = vmatprep.subr.bf16.mxu0 0
      %843 = vmatpush1.bf16.msra.mxu0 %v649
      %844 = vmatprep.subr.bf16.mxu0 0
      %845 = vmatpush1.bf16.msra.mxu0 %v652
      %846 = vmatprep.subr.bf16.mxu0 0
      %847 = vmatpush1.bf16.msra.mxu0 %v655
      %848 = vmatprep.subr.bf16.mxu0 0
      %849 = vmatpush1.bf16.msra.mxu0 %v658
      %850 = vmatprep.subr.bf16.mxu0 0
      %851 = vmatpush1.bf16.msra.mxu0 %v661
      %852 = vmatprep.subr.bf16.mxu0 0
      %853 = vmatpush1.bf16.msra.mxu0 %v664
      %854 = vmatprep.subr.bf16.mxu0 0
      %855 = vmatpush1.bf16.msra.mxu0 0
      %856 = vmatprep.subr.bf16.mxu0 0
      %857 = vmatpush1.bf16.msra.mxu0 0
      %858 = vmatprep.subr.bf16.mxu0 0
      %859 = vmatpush1.bf16.msra.mxu0 0
      %860 = vmatprep.subr.bf16.mxu0 0
      %861 = vmatpush1.bf16.msra.mxu0 0
      %862 = vmatprep.subr.bf16.mxu0 0
      %863 = vmatpush1.bf16.msra.mxu0 0
      %864 = vmatprep.subr.bf16.mxu0 0
      %865 = vmatpush1.bf16.msra.mxu0 0
      %866 = vmatprep.subr.bf16.mxu0 0
      %867 = vmatpush1.bf16.msra.mxu0 0
      %868 = vmatprep.subr.bf16.mxu0 0
      %869 = vmatpush1.bf16.msra.mxu0 0
      %870 = vmatprep.mubr.bf16.mxu0 0
      %871 = vmatmul.mubr.bf16.gmra.mrb[0].mxu0 %v791
      %v872 = vpop.f32.mrb[0].mxu0
      %v873 = vadd.f32 %v557, %v872
      %v874 = vpop.f32.mrb[0].mxu0
      %v875 = vpop.f32.mrb[0].mxu0
      %v876 = vpop.f32.mrb[0].mxu0
      %877 = vdwg.mxu0
      %v878 = vadd.f32 %v794, %v832
      %v879 = vxor.u32 %v878, 2147483648
      %v880 = vmul.f32 %v879, 1.442695
      %v881 = vpow.pop %v880
      %v882 = vadd.f32 %v881, 1.0
      %v883 = vrcp.pop %v882
      %v884 = vmul.f32 1.0, %v883
      %v885 = vadd.f32 %v795, %v834
      %v886 = vxor.u32 %v885, 2147483648
      %v887 = vmul.f32 %v886, 1.442695
      %v888 = vpow.pop %v887
      %v889 = vadd.f32 %v888, 1.0
      %v890 = vrcp.pop %v889
      %v891 = vmul.f32 1.0, %v890
      %v892 = vmul.f32 %v884, %v873
      %v893 = vadd.f32 %v796, %v892
      %v894 = vtanh.pop %v893
      %v895 = vsub.f32 1.0, %v891
      %v896 = vmul.f32 %v895, %v894
      %v897 = vmul.f32 %v891, %v790
      %v898 = vadd.f32 %v896, %v897
      %v899 = vpack.c.bf16 %v898, %v898
      %s900 = scalar_lea.vmem [#allocation3], 4
      %901 = vst [vmem:[%s900] sm:$0xf] %v899
      %s902 = scalar_lea.vmem [#allocation2], 48
      %v903 = vld [vmem:[%s902] sm:$0xff]
      %v904 = vld [vmem:[%s902 + $0x8] sm:$0xff]
      %v905 = vld [vmem:[%s902 + $0x10] sm:$0xff]
      %906 = vmatprep.subr.bf16.mxu0 %v642
      %907 = vmatpush1.bf16.msra.mxu0 %v641
      %908 = vmatprep.subr.bf16.mxu0 %v645
      %909 = vmatpush1.bf16.msra.mxu0 %v644
      %910 = vmatprep.subr.bf16.mxu0 %v648
      %911 = vmatpush1.bf16.msra.mxu0 %v647
      %912 = vmatprep.subr.bf16.mxu0 %v651
      %913 = vmatpush1.bf16.msra.mxu0 %v650
      %914 = vmatprep.subr.bf16.mxu0 %v654
      %915 = vmatpush1.bf16.msra.mxu0 %v653
      %916 = vmatprep.subr.bf16.mxu0 %v657
      %917 = vmatpush1.bf16.msra.mxu0 %v656
      %918 = vmatprep.subr.bf16.mxu0 %v660
      %919 = vmatpush1.bf16.msra.mxu0 %v659
      %920 = vmatprep.subr.bf16.mxu0 %v663
      %921 = vmatpush1.bf16.msra.mxu0 %v662
      %922 = vmatprep.subr.bf16.mxu0 0
      %923 = vmatpush1.bf16.msra.mxu0 0
      %924 = vmatprep.subr.bf16.mxu0 0
      %925 = vmatpush1.bf16.msra.mxu0 0
      %926 = vmatprep.subr.bf16.mxu0 0
      %927 = vmatpush1.bf16.msra.mxu0 0
      %928 = vmatprep.subr.bf16.mxu0 0
      %929 = vmatpush1.bf16.msra.mxu0 0
      %930 = vmatprep.subr.bf16.mxu0 0
      %931 = vmatpush1.bf16.msra.mxu0 0
      %932 = vmatprep.subr.bf16.mxu0 0
      %933 = vmatpush1.bf16.msra.mxu0 0
      %934 = vmatprep.subr.bf16.mxu0 0
      %935 = vmatpush1.bf16.msra.mxu0 0
      %936 = vmatprep.subr.bf16.mxu0 0
      %937 = vmatpush1.bf16.msra.mxu0 0
      %938 = vmatprep.mubr.bf16.mxu0 0
      %939 = vmatmul.mubr.bf16.gmra.mrb[0].mxu0 %v899
      %v940 = vpop.f32.mrb[0].mxu0
      %v941 = vadd.f32 %v549, %v940
      %v942 = vpop.f32.mrb[0].mxu0
      %v943 = vadd.f32 %v553, %v942
      %v944 = vpop.f32.mrb[0].mxu0
      %v945 = vpop.f32.mrb[0].mxu0
      %946 = vdwg.mxu0
      %947 = vmatprep.subr.bf16.mxu0 0
      %948 = vmatpush1.bf16.msra.mxu0 %v643
      %949 = vmatprep.subr.bf16.mxu0 0
      %950 = vmatpush1.bf16.msra.mxu0 %v646
      %951 = vmatprep.subr.bf16.mxu0 0
      %952 = vmatpush1.bf16.msra.mxu0 %v649
      %953 = vmatprep.subr.bf16.mxu0 0
      %954 = vmatpush1.bf16.msra.mxu0 %v652
      %955 = vmatprep.subr.bf16.mxu0 0
      %956 = vmatpush1.bf16.msra.mxu0 %v655
      %957 = vmatprep.subr.bf16.mxu0 0
      %958 = vmatpush1.bf16.msra.mxu0 %v658
      %959 = vmatprep.subr.bf16.mxu0 0
      %960 = vmatpush1.bf16.msra.mxu0 %v661
      %961 = vmatprep.subr.bf16.mxu0 0
      %962 = vmatpush1.bf16.msra.mxu0 %v664
      %963 = vmatprep.subr.bf16.mxu0 0
      %964 = vmatpush1.bf16.msra.mxu0 0
      %965 = vmatprep.subr.bf16.mxu0 0
      %966 = vmatpush1.bf16.msra.mxu0 0
      %967 = vmatprep.subr.bf16.mxu0 0
      %968 = vmatpush1.bf16.msra.mxu0 0
      %969 = vmatprep.subr.bf16.mxu0 0
      %970 = vmatpush1.bf16.msra.mxu0 0
      %971 = vmatprep.subr.bf16.mxu0 0
      %972 = vmatpush1.bf16.msra.mxu0 0
      %973 = vmatprep.subr.bf16.mxu0 0
      %974 = vmatpush1.bf16.msra.mxu0 0
      %975 = vmatprep.subr.bf16.mxu0 0
      %976 = vmatpush1.bf16.msra.mxu0 0
      %977 = vmatprep.subr.bf16.mxu0 0
      %978 = vmatpush1.bf16.msra.mxu0 0
      %979 = vmatprep.mubr.bf16.mxu0 0
      %980 = vmatmul.mubr.bf16.gmra.mrb[0].mxu0 %v899
      %v981 = vpop.f32.mrb[0].mxu0
      %v982 = vadd.f32 %v557, %v981
      %v983 = vpop.f32.mrb[0].mxu0
      %v984 = vpop.f32.mrb[0].mxu0
      %v985 = vpop.f32.mrb[0].mxu0
      %986 = vdwg.mxu0
      %v987 = vadd.f32 %v903, %v941
      %v988 = vxor.u32 %v987, 2147483648
      %v989 = vmul.f32 %v988, 1.442695
      %v990 = vpow.pop %v989
      %v991 = vadd.f32 %v990, 1.0
      %v992 = vrcp.pop %v991
      %v993 = vmul.f32 1.0, %v992
      %v994 = vadd.f32 %v904, %v943
      %v995 = vxor.u32 %v994, 2147483648
      %v996 = vmul.f32 %v995, 1.442695
      %v997 = vpow.pop %v996
      %v998 = vadd.f32 %v997, 1.0
      %v999 = vrcp.pop %v998
      %v1000 = vmul.f32 1.0, %v999
      %v1001 = vmul.f32 %v993, %v982
      %v1002 = vadd.f32 %v905, %v1001
      %v1003 = vtanh.pop %v1002
      %v1004 = vsub.f32 1.0, %v1000
      %v1005 = vmul.f32 %v1004, %v1003
      %v1006 = vmul.f32 %v1000, %v898
      %v1007 = vadd.f32 %v1005, %v1006
      %v1008 = vpack.c.bf16 %v1007, %v1007
      %s1009 = scalar_lea.vmem [#allocation3], 8
      %1010 = vst [vmem:[%s1009] sm:$0xf] %v1008
      %s1011 = scalar_lea.vmem [#allocation2], 72
      %v1012 = vld [vmem:[%s1011] sm:$0xff]
      %v1013 = vld [vmem:[%s1011 + $0x8] sm:$0xff]
      %v1014 = vld [vmem:[%s1011 + $0x10] sm:$0xff]
      %1015 = vmatprep.subr.bf16.mxu0 %v642
      %1016 = vmatpush1.bf16.msra.mxu0 %v641
      %1017 = vmatprep.subr.bf16.mxu0 %v645
      %1018 = vmatpush1.bf16.msra.mxu0 %v644
      %1019 = vmatprep.subr.bf16.mxu0 %v648
      %1020 = vmatpush1.bf16.msra.mxu0 %v647
      %1021 = vmatprep.subr.bf16.mxu0 %v651
      %1022 = vmatpush1.bf16.msra.mxu0 %v650
      %1023 = vmatprep.subr.bf16.mxu0 %v654
      %1024 = vmatpush1.bf16.msra.mxu0 %v653
      %1025 = vmatprep.subr.bf16.mxu0 %v657
      %1026 = vmatpush1.bf16.msra.mxu0 %v656
      %1027 = vmatprep.subr.bf16.mxu0 %v660
      %1028 = vmatpush1.bf16.msra.mxu0 %v659
      %1029 = vmatprep.subr.bf16.mxu0 %v663
      %1030 = vmatpush1.bf16.msra.mxu0 %v662
      %1031 = vmatprep.subr.bf16.mxu0 0
      %1032 = vmatpush1.bf16.msra.mxu0 0
      %1033 = vmatprep.subr.bf16.mxu0 0
      %1034 = vmatpush1.bf16.msra.mxu0 0
      %1035 = vmatprep.subr.bf16.mxu0 0
      %1036 = vmatpush1.bf16.msra.mxu0 0
      %1037 = vmatprep.subr.bf16.mxu0 0
      %1038 = vmatpush1.bf16.msra.mxu0 0
      %1039 = vmatprep.subr.bf16.mxu0 0
      %1040 = vmatpush1.bf16.msra.mxu0 0
      %1041 = vmatprep.subr.bf16.mxu0 0
      %1042 = vmatpush1.bf16.msra.mxu0 0
      %1043 = vmatprep.subr.bf16.mxu0 0
      %1044 = vmatpush1.bf16.msra.mxu0 0
      %1045 = vmatprep.subr.bf16.mxu0 0
      %1046 = vmatpush1.bf16.msra.mxu0 0
      %1047 = vmatprep.mubr.bf16.mxu0 0
      %1048 = vmatmul.mubr.bf16.gmra.mrb[0].mxu0 %v1008
      %v1049 = vpop.f32.mrb[0].mxu0
      %v1050 = vadd.f32 %v549, %v1049
      %v1051 = vpop.f32.mrb[0].mxu0
      %v1052 = vadd.f32 %v553, %v1051
      %v1053 = vpop.f32.mrb[0].mxu0
      %v1054 = vpop.f32.mrb[0].mxu0
      %1055 = vdwg.mxu0
      %1056 = vmatprep.subr.bf16.mxu0 0
      %1057 = vmatpush1.bf16.msra.mxu0 %v643
      %1058 = vmatprep.subr.bf16.mxu0 0
      %1059 = vmatpush1.bf16.msra.mxu0 %v646
      %1060 = vmatprep.subr.bf16.mxu0 0
      %1061 = vmatpush1.bf16.msra.mxu0 %v649
      %1062 = vmatprep.subr.bf16.mxu0 0
      %1063 = vmatpush1.bf16.msra.mxu0 %v652
      %1064 = vmatprep.subr.bf16.mxu0 0
      %1065 = vmatpush1.bf16.msra.mxu0 %v655
      %1066 = vmatprep.subr.bf16.mxu0 0
      %1067 = vmatpush1.bf16.msra.mxu0 %v658
      %1068 = vmatprep.subr.bf16.mxu0 0
      %1069 = vmatpush1.bf16.msra.mxu0 %v661
      %1070 = vmatprep.subr.bf16.mxu0 0
      %1071 = vmatpush1.bf16.msra.mxu0 %v664
      %1072 = vmatprep.subr.bf16.mxu0 0
      %1073 = vmatpush1.bf16.msra.mxu0 0
      %1074 = vmatprep.subr.bf16.mxu0 0
      %1075 = vmatpush1.bf16.msra.mxu0 0
      %1076 = vmatprep.subr.bf16.mxu0 0
      %1077 = vmatpush1.bf16.msra.mxu0 0
      %1078 = vmatprep.subr.bf16.mxu0 0
      %1079 = vmatpush1.bf16.msra.mxu0 0
      %1080 = vmatprep.subr.bf16.mxu0 0
      %1081 = vmatpush1.bf16.msra.mxu0 0
      %1082 = vmatprep.subr.bf16.mxu0 0
      %1083 = vmatpush1.bf16.msra.mxu0 0
      %1084 = vmatprep.subr.bf16.mxu0 0
      %1085 = vmatpush1.bf16.msra.mxu0 0
      %1086 = vmatprep.subr.bf16.mxu0 0
      %1087 = vmatpush1.bf16.msra.mxu0 0
      %1088 = vmatprep.mubr.bf16.mxu0 0
      %1089 = vmatmul.mubr.bf16.gmra.mrb[0].mxu0 %v1008
      %v1090 = vpop.f32.mrb[0].mxu0
      %v1091 = vadd.f32 %v557, %v1090
      %v1092 = vpop.f32.mrb[0].mxu0
      %v1093 = vpop.f32.mrb[0].mxu0
      %v1094 = vpop.f32.mrb[0].mxu0
      %1095 = vdwg.mxu0
      %v1096 = vadd.f32 %v1012, %v1050
      %v1097 = vxor.u32 %v1096, 2147483648
      %v1098 = vmul.f32 %v1097, 1.442695
      %v1099 = vpow.pop %v1098
      %v1100 = vadd.f32 %v1099, 1.0
      %v1101 = vrcp.pop %v1100
      %v1102 = vmul.f32 1.0, %v1101
      %v1103 = vadd.f32 %v1013, %v1052
      %v1104 = vxor.u32 %v1103, 2147483648
      %v1105 = vmul.f32 %v1104, 1.442695
      %v1106 = vpow.pop %v1105
      %v1107 = vadd.f32 %v1106, 1.0
      %v1108 = vrcp.pop %v1107
      %v1109 = vmul.f32 1.0, %v1108
      %v1110 = vmul.f32 %v1102, %v1091
      %v1111 = vadd.f32 %v1014, %v1110
      %v1112 = vtanh.pop %v1111
      %v1113 = vsub.f32 1.0, %v1109
      %v1114 = vmul.f32 %v1113, %v1112
      %v1115 = vmul.f32 %v1109, %v1007
      %v1116 = vadd.f32 %v1114, %v1115
      %v1117 = vpack.c.bf16 %v1116, %v1116
      %s1118 = scalar_lea.vmem [#allocation3], 12
      %1119 = vst [vmem:[%s1118] sm:$0xf] %v1117
      %s1120 = scalar_lea.vmem [#allocation2], 96
      %v1121 = vld [vmem:[%s1120] sm:$0xff]
      %v1122 = vld [vmem:[%s1120 + $0x8] sm:$0xff]
      %v1123 = vld [vmem:[%s1120 + $0x10] sm:$0xff]
      %1124 = vmatprep.subr.bf16.mxu0 %v642
      %1125 = vmatpush1.bf16.msra.mxu0 %v641
      %1126 = vmatprep.subr.bf16.mxu0 %v645
      %1127 = vmatpush1.bf16.msra.mxu0 %v644
      %1128 = vmatprep.subr.bf16.mxu0 %v648
      %1129 = vmatpush1.bf16.msra.mxu0 %v647
      %1130 = vmatprep.subr.bf16.mxu0 %v651
      %1131 = vmatpush1.bf16.msra.mxu0 %v650
      %1132 = vmatprep.subr.bf16.mxu0 %v654
      %1133 = vmatpush1.bf16.msra.mxu0 %v653
      %1134 = vmatprep.subr.bf16.mxu0 %v657
      %1135 = vmatpush1.bf16.msra.mxu0 %v656
      %1136 = vmatprep.subr.bf16.mxu0 %v660
      %1137 = vmatpush1.bf16.msra.mxu0 %v659
      %1138 = vmatprep.subr.bf16.mxu0 %v663
      %1139 = vmatpush1.bf16.msra.mxu0 %v662
      %1140 = vmatprep.subr.bf16.mxu0 0
      %1141 = vmatpush1.bf16.msra.mxu0 0
      %1142 = vmatprep.subr.bf16.mxu0 0
      %1143 = vmatpush1.bf16.msra.mxu0 0
      %1144 = vmatprep.subr.bf16.mxu0 0
      %1145 = vmatpush1.bf16.msra.mxu0 0
      %1146 = vmatprep.subr.bf16.mxu0 0
      %1147 = vmatpush1.bf16.msra.mxu0 0
      %1148 = vmatprep.subr.bf16.mxu0 0
      %1149 = vmatpush1.bf16.msra.mxu0 0
      %1150 = vmatprep.subr.bf16.mxu0 0
      %1151 = vmatpush1.bf16.msra.mxu0 0
      %1152 = vmatprep.subr.bf16.mxu0 0
      %1153 = vmatpush1.bf16.msra.mxu0 0
      %1154 = vmatprep.subr.bf16.mxu0 0
      %1155 = vmatpush1.bf16.msra.mxu0 0
      %1156 = vmatprep.mubr.bf16.mxu0 0
      %1157 = vmatmul.mubr.bf16.gmra.mrb[0].mxu0 %v1117
      %v1158 = vpop.f32.mrb[0].mxu0
      %v1159 = vadd.f32 %v549, %v1158
      %v1160 = vpop.f32.mrb[0].mxu0
      %v1161 = vadd.f32 %v553, %v1160
      %v1162 = vpop.f32.mrb[0].mxu0
      %v1163 = vpop.f32.mrb[0].mxu0
      %1164 = vdwg.mxu0
      %1165 = vmatprep.subr.bf16.mxu0 0
      %1166 = vmatpush1.bf16.msra.mxu0 %v643
      %1167 = vmatprep.subr.bf16.mxu0 0
      %1168 = vmatpush1.bf16.msra.mxu0 %v646
      %1169 = vmatprep.subr.bf16.mxu0 0
      %1170 = vmatpush1.bf16.msra.mxu0 %v649
      %1171 = vmatprep.subr.bf16.mxu0 0
      %1172 = vmatpush1.bf16.msra.mxu0 %v652
      %1173 = vmatprep.subr.bf16.mxu0 0
      %1174 = vmatpush1.bf16.msra.mxu0 %v655
      %1175 = vmatprep.subr.bf16.mxu0 0
      %1176 = vmatpush1.bf16.msra.mxu0 %v658
      %1177 = vmatprep.subr.bf16.mxu0 0
      %1178 = vmatpush1.bf16.msra.mxu0 %v661
      %1179 = vmatprep.subr.bf16.mxu0 0
      %1180 = vmatpush1.bf16.msra.mxu0 %v664
      %1181 = vmatprep.subr.bf16.mxu0 0
      %1182 = vmatpush1.bf16.msra.mxu0 0
      %1183 = vmatprep.subr.bf16.mxu0 0
      %1184 = vmatpush1.bf16.msra.mxu0 0
      %1185 = vmatprep.subr.bf16.mxu0 0
      %1186 = vmatpush1.bf16.msra.mxu0 0
      %1187 = vmatprep.subr.bf16.mxu0 0
      %1188 = vmatpush1.bf16.msra.mxu0 0
      %1189 = vmatprep.subr.bf16.mxu0 0
      %1190 = vmatpush1.bf16.msra.mxu0 0
      %1191 = vmatprep.subr.bf16.mxu0 0
      %1192 = vmatpush1.bf16.msra.mxu0 0
      %1193 = vmatprep.subr.bf16.mxu0 0
      %1194 = vmatpush1.bf16.msra.mxu0 0
      %1195 = vmatprep.subr.bf16.mxu0 0
      %1196 = vmatpush1.bf16.msra.mxu0 0
      %1197 = vmatprep.mubr.bf16.mxu0 0
      %1198 = vmatmul.mubr.bf16.gmra.mrb[0].mxu0 %v1117
      %v1199 = vpop.f32.mrb[0].mxu0
      %v1200 = vadd.f32 %v557, %v1199
      %v1201 = vpop.f32.mrb[0].mxu0
      %v1202 = vpop.f32.mrb[0].mxu0
      %v1203 = vpop.f32.mrb[0].mxu0
      %1204 = vdwg.mxu0
      %v1205 = vadd.f32 %v1121, %v1159
      %v1206 = vxor.u32 %v1205, 2147483648
      %v1207 = vmul.f32 %v1206, 1.442695
      %v1208 = vpow.pop %v1207
      %v1209 = vadd.f32 %v1208, 1.0
      %v1210 = vrcp.pop %v1209
      %v1211 = vmul.f32 1.0, %v1210
      %v1212 = vadd.f32 %v1122, %v1161
      %v1213 = vxor.u32 %v1212, 2147483648
      %v1214 = vmul.f32 %v1213, 1.442695
      %v1215 = vpow.pop %v1214
      %v1216 = vadd.f32 %v1215, 1.0
      %v1217 = vrcp.pop %v1216
      %v1218 = vmul.f32 1.0, %v1217
      %v1219 = vmul.f32 %v1211, %v1200
      %v1220 = vadd.f32 %v1123, %v1219
      %v1221 = vtanh.pop %v1220
      %v1222 = vsub.f32 1.0, %v1218
      %v1223 = vmul.f32 %v1222, %v1221
      %v1224 = vmul.f32 %v1218, %v1116
      %v1225 = vadd.f32 %v1223, %v1224
      %v1226 = vpack.c.bf16 %v1225, %v1225
      %s1227 = scalar_lea.vmem [#allocation3], 16
      %1228 = vst [vmem:[%s1227] sm:$0xf] %v1226
      %s1229 = scalar_lea.vmem [#allocation2], 120
      %v1230 = vld [vmem:[%s1229] sm:$0xff]
      %v1231 = vld [vmem:[%s1229 + $0x8] sm:$0xff]
      %v1232 = vld [vmem:[%s1229 + $0x10] sm:$0xff]
      %1233 = vmatprep.subr.bf16.mxu0 %v642
      %1234 = vmatpush1.bf16.msra.mxu0 %v641
      %1235 = vmatprep.subr.bf16.mxu0 %v645
      %1236 = vmatpush1.bf16.msra.mxu0 %v644
      %1237 = vmatprep.subr.bf16.mxu0 %v648
      %1238 = vmatpush1.bf16.msra.mxu0 %v647
      %1239 = vmatprep.subr.bf16.mxu0 %v651
      %1240 = vmatpush1.bf16.msra.mxu0 %v650
      %1241 = vmatprep.subr.bf16.mxu0 %v654
      %1242 = vmatpush1.bf16.msra.mxu0 %v653
      %1243 = vmatprep.subr.bf16.mxu0 %v657
      %1244 = vmatpush1.bf16.msra.mxu0 %v656
      %1245 = vmatprep.subr.bf16.mxu0 %v660
      %1246 = vmatpush1.bf16.msra.mxu0 %v659
      %1247 = vmatprep.subr.bf16.mxu0 %v663
      %1248 = vmatpush1.bf16.msra.mxu0 %v662
      %1249 = vmatprep.subr.bf16.mxu0 0
      %1250 = vmatpush1.bf16.msra.mxu0 0
      %1251 = vmatprep.subr.bf16.mxu0 0
      %1252 = vmatpush1.bf16.msra.mxu0 0
      %1253 = vmatprep.subr.bf16.mxu0 0
      %1254 = vmatpush1.bf16.msra.mxu0 0
      %1255 = vmatprep.subr.bf16.mxu0 0
      %1256 = vmatpush1.bf16.msra.mxu0 0
      %1257 = vmatprep.subr.bf16.mxu0 0
      %1258 = vmatpush1.bf16.msra.mxu0 0
      %1259 = vmatprep.subr.bf16.mxu0 0
      %1260 = vmatpush1.bf16.msra.mxu0 0
      %1261 = vmatprep.subr.bf16.mxu0 0
      %1262 = vmatpush1.bf16.msra.mxu0 0
      %1263 = vmatprep.subr.bf16.mxu0 0
      %1264 = vmatpush1.bf16.msra.mxu0 0
      %1265 = vmatprep.mubr.bf16.mxu0 0
      %1266 = vmatmul.mubr.bf16.gmra.mrb[0].mxu0 %v1226
      %v1267 = vpop.f32.mrb[0].mxu0
      %v1268 = vadd.f32 %v549, %v1267
      %v1269 = vpop.f32.mrb[0].mxu0
      %v1270 = vadd.f32 %v553, %v1269
      %v1271 = vpop.f32.mrb[0].mxu0
      %v1272 = vpop.f32.mrb[0].mxu0
      %1273 = vdwg.mxu0
      %1274 = vmatprep.subr.bf16.mxu0 0
      %1275 = vmatpush1.bf16.msra.mxu0 %v643
      %1276 = vmatprep.subr.bf16.mxu0 0
      %1277 = vmatpush1.bf16.msra.mxu0 %v646
      %1278 = vmatprep.subr.bf16.mxu0 0
      %1279 = vmatpush1.bf16.msra.mxu0 %v649
      %1280 = vmatprep.subr.bf16.mxu0 0
      %1281 = vmatpush1.bf16.msra.mxu0 %v652
      %1282 = vmatprep.subr.bf16.mxu0 0
      %1283 = vmatpush1.bf16.msra.mxu0 %v655
      %1284 = vmatprep.subr.bf16.mxu0 0
      %1285 = vmatpush1.bf16.msra.mxu0 %v658
      %1286 = vmatprep.subr.bf16.mxu0 0
      %1287 = vmatpush1.bf16.msra.mxu0 %v661
      %1288 = vmatprep.subr.bf16.mxu0 0
      %1289 = vmatpush1.bf16.msra.mxu0 %v664
      %1290 = vmatprep.subr.bf16.mxu0 0
      %1291 = vmatpush1.bf16.msra.mxu0 0
      %1292 = vmatprep.subr.bf16.mxu0 0
      %1293 = vmatpush1.bf16.msra.mxu0 0
      %1294 = vmatprep.subr.bf16.mxu0 0
      %1295 = vmatpush1.bf16.msra.mxu0 0
      %1296 = vmatprep.subr.bf16.mxu0 0
      %1297 = vmatpush1.bf16.msra.mxu0 0
      %1298 = vmatprep.subr.bf16.mxu0 0
      %1299 = vmatpush1.bf16.msra.mxu0 0
      %1300 = vmatprep.subr.bf16.mxu0 0
      %1301 = vmatpush1.bf16.msra.mxu0 0
      %1302 = vmatprep.subr.bf16.mxu0 0
      %1303 = vmatpush1.bf16.msra.mxu0 0
      %1304 = vmatprep.subr.bf16.mxu0 0
      %1305 = vmatpush1.bf16.msra.mxu0 0
      %1306 = vmatprep.mubr.bf16.mxu0 0
      %1307 = vmatmul.mubr.bf16.gmra.mrb[0].mxu0 %v1226
      %v1308 = vpop.f32.mrb[0].mxu0
      %v1309 = vadd.f32 %v557, %v1308
      %v1310 = vpop.f32.mrb[0].mxu0
      %v1311 = vpop.f32.mrb[0].mxu0
      %v1312 = vpop.f32.mrb[0].mxu0
      %1313 = vdwg.mxu0
      %v1314 = vadd.f32 %v1230, %v1268
      %v1315 = vxor.u32 %v1314, 2147483648
      %v1316 = vmul.f32 %v1315, 1.442695
      %v1317 = vpow.pop %v1316
      %v1318 = vadd.f32 %v1317, 1.0
      %v1319 = vrcp.pop %v1318
      %v1320 = vmul.f32 1.0, %v1319
      %v1321 = vadd.f32 %v1231, %v1270
      %v1322 = vxor.u32 %v1321, 2147483648
      %v1323 = vmul.f32 %v1322, 1.442695
      %v1324 = vpow.pop %v1323
      %v1325 = vadd.f32 %v1324, 1.0
      %v1326 = vrcp.pop %v1325
      %v1327 = vmul.f32 1.0, %v1326
      %v1328 = vmul.f32 %v1320, %v1309
      %v1329 = vadd.f32 %v1232, %v1328
      %v1330 = vtanh.pop %v1329
      %v1331 = vsub.f32 1.0, %v1327
      %v1332 = vmul.f32 %v1331, %v1330
      %v1333 = vmul.f32 %v1327, %v1225
      %v1334 = vadd.f32 %v1332, %v1333
      %v1335 = vpack.c.bf16 %v1334, %v1334
      %s1336 = scalar_lea.vmem [#allocation3], 20
      %1337 = vst [vmem:[%s1336] sm:$0xf] %v1335
      %s1338 = scalar_lea.vmem [#allocation2], 144
      %v1339 = vld [vmem:[%s1338] sm:$0xff]
      %v1340 = vld [vmem:[%s1338 + $0x8] sm:$0xff]
      %v1341 = vld [vmem:[%s1338 + $0x10] sm:$0xff]
      %1342 = vmatprep.subr.bf16.mxu0 %v642
      %1343 = vmatpush1.bf16.msra.mxu0 %v641
      %1344 = vmatprep.subr.bf16.mxu0 %v645
      %1345 = vmatpush1.bf16.msra.mxu0 %v644
      %1346 = vmatprep.subr.bf16.mxu0 %v648
      %1347 = vmatpush1.bf16.msra.mxu0 %v647
      %1348 = vmatprep.subr.bf16.mxu0 %v651
      %1349 = vmatpush1.bf16.msra.mxu0 %v650
      %1350 = vmatprep.subr.bf16.mxu0 %v654
      %1351 = vmatpush1.bf16.msra.mxu0 %v653
      %1352 = vmatprep.subr.bf16.mxu0 %v657
      %1353 = vmatpush1.bf16.msra.mxu0 %v656
      %1354 = vmatprep.subr.bf16.mxu0 %v660
      %1355 = vmatpush1.bf16.msra.mxu0 %v659
      %1356 = vmatprep.subr.bf16.mxu0 %v663
      %1357 = vmatpush1.bf16.msra.mxu0 %v662
      %1358 = vmatprep.subr.bf16.mxu0 0
      %1359 = vmatpush1.bf16.msra.mxu0 0
      %1360 = vmatprep.subr.bf16.mxu0 0
      %1361 = vmatpush1.bf16.msra.mxu0 0
      %1362 = vmatprep.subr.bf16.mxu0 0
      %1363 = vmatpush1.bf16.msra.mxu0 0
      %1364 = vmatprep.subr.bf16.mxu0 0
      %1365 = vmatpush1.bf16.msra.mxu0 0
      %1366 = vmatprep.subr.bf16.mxu0 0
      %1367 = vmatpush1.bf16.msra.mxu0 0
      %1368 = vmatprep.subr.bf16.mxu0 0
      %1369 = vmatpush1.bf16.msra.mxu0 0
      %1370 = vmatprep.subr.bf16.mxu0 0
      %1371 = vmatpush1.bf16.msra.mxu0 0
      %1372 = vmatprep.subr.bf16.mxu0 0
      %1373 = vmatpush1.bf16.msra.mxu0 0
      %1374 = vmatprep.mubr.bf16.mxu0 0
      %1375 = vmatmul.mubr.bf16.gmra.mrb[0].mxu0 %v1335
      %v1376 = vpop.f32.mrb[0].mxu0
      %v1377 = vadd.f32 %v549, %v1376
      %v1378 = vpop.f32.mrb[0].mxu0
      %v1379 = vadd.f32 %v553, %v1378
      %v1380 = vpop.f32.mrb[0].mxu0
      %v1381 = vpop.f32.mrb[0].mxu0
      %1382 = vdwg.mxu0
      %1383 = vmatprep.subr.bf16.mxu0 0
      %1384 = vmatpush1.bf16.msra.mxu0 %v643
      %1385 = vmatprep.subr.bf16.mxu0 0
      %1386 = vmatpush1.bf16.msra.mxu0 %v646
      %1387 = vmatprep.subr.bf16.mxu0 0
      %1388 = vmatpush1.bf16.msra.mxu0 %v649
      %1389 = vmatprep.subr.bf16.mxu0 0
      %1390 = vmatpush1.bf16.msra.mxu0 %v652
      %1391 = vmatprep.subr.bf16.mxu0 0
      %1392 = vmatpush1.bf16.msra.mxu0 %v655
      %1393 = vmatprep.subr.bf16.mxu0 0
      %1394 = vmatpush1.bf16.msra.mxu0 %v658
      %1395 = vmatprep.subr.bf16.mxu0 0
      %1396 = vmatpush1.bf16.msra.mxu0 %v661
      %1397 = vmatprep.subr.bf16.mxu0 0
      %1398 = vmatpush1.bf16.msra.mxu0 %v664
      %1399 = vmatprep.subr.bf16.mxu0 0
      %1400 = vmatpush1.bf16.msra.mxu0 0
      %1401 = vmatprep.subr.bf16.mxu0 0
      %1402 = vmatpush1.bf16.msra.mxu0 0
      %1403 = vmatprep.subr.bf16.mxu0 0
      %1404 = vmatpush1.bf16.msra.mxu0 0
      %1405 = vmatprep.subr.bf16.mxu0 0
      %1406 = vmatpush1.bf16.msra.mxu0 0
      %1407 = vmatprep.subr.bf16.mxu0 0
      %1408 = vmatpush1.bf16.msra.mxu0 0
      %1409 = vmatprep.subr.bf16.mxu0 0
      %1410 = vmatpush1.bf16.msra.mxu0 0
      %1411 = vmatprep.subr.bf16.mxu0 0
      %1412 = vmatpush1.bf16.msra.mxu0 0
      %1413 = vmatprep.subr.bf16.mxu0 0
      %1414 = vmatpush1.bf16.msra.mxu0 0
      %1415 = vmatprep.mubr.bf16.mxu0 0
      %1416 = vmatmul.mubr.bf16.gmra.mrb[0].mxu0 %v1335
      %v1417 = vpop.f32.mrb[0].mxu0
      %v1418 = vadd.f32 %v557, %v1417
      %v1419 = vpop.f32.mrb[0].mxu0
      %v1420 = vpop.f32.mrb[0].mxu0
      %v1421 = vpop.f32.mrb[0].mxu0
      %1422 = vdwg.mxu0
      %v1423 = vadd.f32 %v1339, %v1377
      %v1424 = vxor.u32 %v1423, 2147483648
      %v1425 = vmul.f32 %v1424, 1.442695
      %v1426 = vpow.pop %v1425
      %v1427 = vadd.f32 %v1426, 1.0
      %v1428 = vrcp.pop %v1427
      %v1429 = vmul.f32 1.0, %v1428
      %v1430 = vadd.f32 %v1340, %v1379
      %v1431 = vxor.u32 %v1430, 2147483648
      %v1432 = vmul.f32 %v1431, 1.442695
      %v1433 = vpow.pop %v1432
      %v1434 = vadd.f32 %v1433, 1.0
      %v1435 = vrcp.pop %v1434
      %v1436 = vmul.f32 1.0, %v1435
      %v1437 = vmul.f32 %v1429, %v1418
      %v1438 = vadd.f32 %v1341, %v1437
      %v1439 = vtanh.pop %v1438
      %v1440 = vsub.f32 1.0, %v1436
      %v1441 = vmul.f32 %v1440, %v1439
      %v1442 = vmul.f32 %v1436, %v1334
      %v1443 = vadd.f32 %v1441, %v1442
      %v1444 = vpack.c.bf16 %v1443, %v1443
      %s1445 = scalar_lea.vmem [#allocation3], 24
      %1446 = vst [vmem:[%s1445] sm:$0xf] %v1444
      %s1447 = scalar_lea.vmem [#allocation2], 168
      %v1448 = vld [vmem:[%s1447] sm:$0xff]
      %v1449 = vld [vmem:[%s1447 + $0x8] sm:$0xff]
      %v1450 = vld [vmem:[%s1447 + $0x10] sm:$0xff]
      %1451 = vmatprep.subr.bf16.mxu0 %v642
      %1452 = vmatpush1.bf16.msra.mxu0 %v641
      %1453 = vmatprep.subr.bf16.mxu0 %v645
      %1454 = vmatpush1.bf16.msra.mxu0 %v644
      %1455 = vmatprep.subr.bf16.mxu0 %v648
      %1456 = vmatpush1.bf16.msra.mxu0 %v647
      %1457 = vmatprep.subr.bf16.mxu0 %v651
      %1458 = vmatpush1.bf16.msra.mxu0 %v650
      %1459 = vmatprep.subr.bf16.mxu0 %v654
      %1460 = vmatpush1.bf16.msra.mxu0 %v653
      %1461 = vmatprep.subr.bf16.mxu0 %v657
      %1462 = vmatpush1.bf16.msra.mxu0 %v656
      %1463 = vmatprep.subr.bf16.mxu0 %v660
      %1464 = vmatpush1.bf16.msra.mxu0 %v659
      %1465 = vmatprep.subr.bf16.mxu0 %v663
      %1466 = vmatpush1.bf16.msra.mxu0 %v662
      %1467 = vmatprep.subr.bf16.mxu0 0
      %1468 = vmatpush1.bf16.msra.mxu0 0
      %1469 = vmatprep.subr.bf16.mxu0 0
      %1470 = vmatpush1.bf16.msra.mxu0 0
      %1471 = vmatprep.subr.bf16.mxu0 0
      %1472 = vmatpush1.bf16.msra.mxu0 0
      %1473 = vmatprep.subr.bf16.mxu0 0
      %1474 = vmatpush1.bf16.msra.mxu0 0
      %1475 = vmatprep.subr.bf16.mxu0 0
      %1476 = vmatpush1.bf16.msra.mxu0 0
      %1477 = vmatprep.subr.bf16.mxu0 0
      %1478 = vmatpush1.bf16.msra.mxu0 0
      %1479 = vmatprep.subr.bf16.mxu0 0
      %1480 = vmatpush1.bf16.msra.mxu0 0
      %1481 = vmatprep.subr.bf16.mxu0 0
      %1482 = vmatpush1.bf16.msra.mxu0 0
      %1483 = vmatprep.mubr.bf16.mxu0 0
      %1484 = vmatmul.mubr.bf16.gmra.mrb[0].mxu0 %v1444
      %v1485 = vpop.f32.mrb[0].mxu0
      %v1486 = vadd.f32 %v549, %v1485
      %v1487 = vpop.f32.mrb[0].mxu0
      %v1488 = vadd.f32 %v553, %v1487
      %v1489 = vpop.f32.mrb[0].mxu0
      %v1490 = vpop.f32.mrb[0].mxu0
      %1491 = vdwg.mxu0
      %1492 = vmatprep.subr.bf16.mxu0 0
      %1493 = vmatpush1.bf16.msra.mxu0 %v643
      %1494 = vmatprep.subr.bf16.mxu0 0
      %1495 = vmatpush1.bf16.msra.mxu0 %v646
      %1496 = vmatprep.subr.bf16.mxu0 0
      %1497 = vmatpush1.bf16.msra.mxu0 %v649
      %1498 = vmatprep.subr.bf16.mxu0 0
      %1499 = vmatpush1.bf16.msra.mxu0 %v652
      %1500 = vmatprep.subr.bf16.mxu0 0
      %1501 = vmatpush1.bf16.msra.mxu0 %v655
      %1502 = vmatprep.subr.bf16.mxu0 0
      %1503 = vmatpush1.bf16.msra.mxu0 %v658
      %1504 = vmatprep.subr.bf16.mxu0 0
      %1505 = vmatpush1.bf16.msra.mxu0 %v661
      %1506 = vmatprep.subr.bf16.mxu0 0
      %1507 = vmatpush1.bf16.msra.mxu0 %v664
      %1508 = vmatprep.subr.bf16.mxu0 0
      %1509 = vmatpush1.bf16.msra.mxu0 0
      %1510 = vmatprep.subr.bf16.mxu0 0
      %1511 = vmatpush1.bf16.msra.mxu0 0
      %1512 = vmatprep.subr.bf16.mxu0 0
      %1513 = vmatpush1.bf16.msra.mxu0 0
      %1514 = vmatprep.subr.bf16.mxu0 0
      %1515 = vmatpush1.bf16.msra.mxu0 0
      %1516 = vmatprep.subr.bf16.mxu0 0
      %1517 = vmatpush1.bf16.msra.mxu0 0
      %1518 = vmatprep.subr.bf16.mxu0 0
      %1519 = vmatpush1.bf16.msra.mxu0 0
      %1520 = vmatprep.subr.bf16.mxu0 0
      %1521 = vmatpush1.bf16.msra.mxu0 0
      %1522 = vmatprep.subr.bf16.mxu0 0
      %1523 = vmatpush1.bf16.msra.mxu0 0
      %1524 = vmatprep.mubr.bf16.mxu0 0
      %1525 = vmatmul.mubr.bf16.gmra.mrb[0].mxu0 %v1444
      %v1526 = vpop.f32.mrb[0].mxu0
      %v1527 = vadd.f32 %v557, %v1526
      %v1528 = vpop.f32.mrb[0].mxu0
      %v1529 = vpop.f32.mrb[0].mxu0
      %v1530 = vpop.f32.mrb[0].mxu0
      %1531 = vdwg.mxu0
      %v1532 = vadd.f32 %v1448, %v1486
      %v1533 = vxor.u32 %v1532, 2147483648
      %v1534 = vmul.f32 %v1533, 1.442695
      %v1535 = vpow.pop %v1534
      %v1536 = vadd.f32 %v1535, 1.0
      %v1537 = vrcp.pop %v1536
      %v1538 = vmul.f32 1.0, %v1537
      %v1539 = vadd.f32 %v1449, %v1488
      %v1540 = vxor.u32 %v1539, 2147483648
      %v1541 = vmul.f32 %v1540, 1.442695
      %v1542 = vpow.pop %v1541
      %v1543 = vadd.f32 %v1542, 1.0
      %v1544 = vrcp.pop %v1543
      %v1545 = vmul.f32 1.0, %v1544
      %v1546 = vmul.f32 %v1538, %v1527
      %v1547 = vadd.f32 %v1450, %v1546
      %v1548 = vtanh.pop %v1547
      %v1549 = vsub.f32 1.0, %v1545
      %v1550 = vmul.f32 %v1549, %v1548
      %v1551 = vmul.f32 %v1545, %v1443
      %v1552 = vadd.f32 %v1550, %v1551
      %v1553 = vpack.c.bf16 %v1552, %v1552
      %s1554 = scalar_lea.vmem [#allocation3], 28
      %1555 = vst [vmem:[%s1554] sm:$0xf] %v1553
    $region69: #{tpu_custom_call.1} parent=1 // pred_fallthru
      _
    %v1556 = vld [vmem:[#allocation3] sm:$0xf]
    %v1557 = vld [vmem:[#allocation3 + $0x4] sm:$0xf]
    %v1558 = vld [vmem:[#allocation3 + $0x8] sm:$0xf]
    %v1559 = vld [vmem:[#allocation3 + $0xc] sm:$0xf]
    %v1560 = vld [vmem:[#allocation3 + $0x10] sm:$0xf]
    %v1561 = vld [vmem:[#allocation3 + $0x14] sm:$0xf]
    %v1562 = vld [vmem:[#allocation3 + $0x18] sm:$0xf]
    %v1563 = vld [vmem:[#allocation3 + $0x1c] sm:$0xf]
    %v1564 = vld [vmem:[#allocation15] sm:$0xf]
    %v1565 = vld [vmem:[#allocation15 + $0x4] sm:$0xf]
    %v1566 = vld [vmem:[#allocation15 + $0x8] sm:$0xf]
    %v1567 = vld [vmem:[#allocation15 + $0xc] sm:$0xf]
    %v1568 = vld [vmem:[#allocation15 + $0x10] sm:$0xf]
    %v1569 = vld [vmem:[#allocation15 + $0x14] sm:$0xf]
    %v1570 = vld [vmem:[#allocation15 + $0x18] sm:$0xf]
    %v1571 = vld [vmem:[#allocation15 + $0x1c] sm:$0xf]
    %v1572 = vld [vmem:[#allocation15 + $0x20] sm:$0xf]
    %v1573 = vld [vmem:[#allocation15 + $0x24] sm:$0xf]
    %v1574 = vld [vmem:[#allocation15 + $0x28] sm:$0xf]
    %v1575 = vld [vmem:[#allocation15 + $0x2c] sm:$0xf]
    %v1576 = vld [vmem:[#allocation15 + $0x30] sm:$0xf]
    %v1577 = vld [vmem:[#allocation15 + $0x34] sm:$0xf]
    %v1578 = vld [vmem:[#allocation15 + $0x38] sm:$0xf]
    %v1579 = vld [vmem:[#allocation15 + $0x3c] sm:$0xf]
    %v1580 = vld [vmem:[#allocation16] sm:$0x1]
    %v1582 = vlaneseq
    %v1583 = vshrl.u32 %v1582, 7
    %v1584 = vsub.s32 0, %v1583
    %v1585 = vrot.slane %v1580, %v1584
    %v1595 = vunpack.c.l.b16 %v1556
    %v1596 = vunpack.c.l.b16 %v1557
    %v1597 = vunpack.c.l.b16 %v1558
    %v1598 = vunpack.c.l.b16 %v1559
    %v1599 = vunpack.c.l.b16 %v1560
    %v1600 = vunpack.c.l.b16 %v1561
    %v1601 = vunpack.c.l.b16 %v1562
    %v1602 = vunpack.c.l.b16 %v1563
    %v1603 = vpack.c.b16 %v1596, %v1595
    %v1604 = vpack.c.b16 %v1598, %v1597
    %v1605 = vpack.c.b16 %v1600, %v1599
    %v1606 = vpack.c.b16 %v1602, %v1601
    %v1627 = vunpack.c.l.b16 %v1564
    %v1628 = vunpack.c.l.b16 %v1565
    %v1629 = vunpack.c.l.b16 %v1566
    %v1630 = vunpack.c.l.b16 %v1567
    %v1631 = vunpack.c.l.b16 %v1568
    %v1632 = vunpack.c.l.b16 %v1569
    %v1633 = vunpack.c.l.b16 %v1570
    %v1634 = vunpack.c.l.b16 %v1571
    %v1635 = vunpack.c.l.b16 %v1572
    %v1636 = vunpack.c.l.b16 %v1573
    %v1637 = vunpack.c.l.b16 %v1574
    %v1638 = vunpack.c.l.b16 %v1575
    %v1639 = vunpack.c.l.b16 %v1576
    %v1640 = vunpack.c.l.b16 %v1577
    %v1641 = vunpack.c.l.b16 %v1578
    %v1642 = vunpack.c.l.b16 %v1579
    %v1643 = vpack.c.b16 %v1628, %v1627
    %v1644 = vpack.c.b16 %v1630, %v1629
    %v1645 = vpack.c.b16 %v1632, %v1631
    %v1646 = vpack.c.b16 %v1634, %v1633
    %v1647 = vpack.c.b16 %v1636, %v1635
    %v1648 = vpack.c.b16 %v1638, %v1637
    %v1649 = vpack.c.b16 %v1640, %v1639
    %v1650 = vpack.c.b16 %v1642, %v1641
    %1659 = vmatprep.subr.bf16.mxu0 0
    %1660 = vmatpush1.bf16.msra.mxu0 %v1643
    %1661 = vmatprep.subr.bf16.mxu0 0
    %1662 = vmatpush1.bf16.msra.mxu0 %v1644
    %1663 = vmatprep.subr.bf16.mxu0 0
    %1664 = vmatpush1.bf16.msra.mxu0 %v1645
    %1665 = vmatprep.subr.bf16.mxu0 0
    %1666 = vmatpush1.bf16.msra.mxu0 %v1646
    %1667 = vmatprep.subr.bf16.mxu0 0
    %1668 = vmatpush1.bf16.msra.mxu0 %v1647
    %1669 = vmatprep.subr.bf16.mxu0 0
    %1670 = vmatpush1.bf16.msra.mxu0 %v1648
    %1671 = vmatprep.subr.bf16.mxu0 0
    %1672 = vmatpush1.bf16.msra.mxu0 %v1649
    %1673 = vmatprep.subr.bf16.mxu0 0
    %1674 = vmatpush1.bf16.msra.mxu0 %v1650
    %1675 = vmatprep.subr.bf16.mxu0 0
    %1676 = vmatpush1.bf16.msra.mxu0 0
    %1677 = vmatprep.subr.bf16.mxu0 0
    %1678 = vmatpush1.bf16.msra.mxu0 0
    %1679 = vmatprep.subr.bf16.mxu0 0
    %1680 = vmatpush1.bf16.msra.mxu0 0
    %1681 = vmatprep.subr.bf16.mxu0 0
    %1682 = vmatpush1.bf16.msra.mxu0 0
    %1683 = vmatprep.subr.bf16.mxu0 0
    %1684 = vmatpush1.bf16.msra.mxu0 0
    %1685 = vmatprep.subr.bf16.mxu0 0
    %1686 = vmatpush1.bf16.msra.mxu0 0
    %1687 = vmatprep.subr.bf16.mxu0 0
    %1688 = vmatpush1.bf16.msra.mxu0 0
    %1689 = vmatprep.subr.bf16.mxu0 0
    %1690 = vmatpush1.bf16.msra.mxu0 0
    %1691 = vmatprep.mubr.bf16.mxu0 0
    %1692 = vmatmul.mubr.bf16.gmra.mrb[0].mxu0 %v1603
    %v1693 = vpop.f32.mrb[0].mxu0
    %v1694 = vadd.f32 %v1585, %v1693
    %v1695 = vpop.f32.mrb[0].mxu0
    %v1696 = vpop.f32.mrb[0].mxu0
    %v1697 = vadd.f32 %v1585, %v1696
    %v1698 = vpop.f32.mrb[0].mxu0
    %1699 = vmatprep.mubr.bf16.mxu0 0
    %1700 = vmatmul.mubr.bf16.gmra.mrb[0].mxu0 %v1604
    %v1701 = vpop.f32.mrb[0].mxu0
    %v1702 = vadd.f32 %v1585, %v1701
    %v1703 = vpop.f32.mrb[0].mxu0
    %v1704 = vpop.f32.mrb[0].mxu0
    %v1705 = vadd.f32 %v1585, %v1704
    %v1706 = vpop.f32.mrb[0].mxu0
    %1707 = vmatprep.mubr.bf16.mxu0 0
    %1708 = vmatmul.mubr.bf16.gmra.mrb[0].mxu0 %v1605
    %v1709 = vpop.f32.mrb[0].mxu0
    %v1710 = vadd.f32 %v1585, %v1709
    %v1711 = vpop.f32.mrb[0].mxu0
    %v1712 = vpop.f32.mrb[0].mxu0
    %v1713 = vadd.f32 %v1585, %v1712
    %v1714 = vpop.f32.mrb[0].mxu0
    %1715 = vmatprep.mubr.bf16.mxu0 0
    %1716 = vmatmul.mubr.bf16.gmra.mrb[0].mxu0 %v1606
    %v1717 = vpop.f32.mrb[0].mxu0
    %v1718 = vadd.f32 %v1585, %v1717
    %v1719 = vpop.f32.mrb[0].mxu0
    %v1720 = vpop.f32.mrb[0].mxu0
    %v1721 = vadd.f32 %v1585, %v1720
    %v1722 = vpop.f32.mrb[0].mxu0
    %1723 = vdwg.mxu0
    %1724 = vst [vmem:[#allocation18] sm:$0xff] %v1694
    %1725 = vst [vmem:[#allocation18 + $0x8] sm:$0xff] %v1697
    %1726 = vst [vmem:[#allocation18 + $0x10] sm:$0xff] %v1702
    %1727 = vst [vmem:[#allocation18 + $0x18] sm:$0xff] %v1705
    %1728 = vst [vmem:[#allocation18 + $0x20] sm:$0xff] %v1710
    %1729 = vst [vmem:[#allocation18 + $0x28] sm:$0xff] %v1713
    %1730 = vst [vmem:[#allocation18 + $0x30] sm:$0xff] %v1718
    %1731 = vst [vmem:[#allocation18 + $0x38] sm:$0xff] %v1721
    // Predicated region
    $region70: #{tpu_custom_call.1} parent=1 // pred_check
      _
    $region71: #{tpu_custom_call.1} parent=1 // pred_check_branch
      %1733 = sbr.rel (0) target = $region73
    $region72: #{tpu_custom_call.1} parent=1 // pred_region
      %s1735 = ssub.s32 1024, 1024
      %1736 = vsyncadd [#allocation6], %s1735
      %s1737 = sshll.u32 [#allocation18], 4
      %s1738 = int_to_ptr.vmem [resolvable:$true] %s1737
      %1743 = dma.vmem_to_hbm [thread:$0]  %s1738, 1024, %s8, [#allocation6], 128, 128, 8
    $region73: #{tpu_custom_call.1} parent=1 // pred_fallthru
      _
    // Predicated region
    $region74: #{tpu_custom_call.1} parent=1 // pred_check
      _
    $region75: #{tpu_custom_call.1} parent=1 // pred_check_branch
      %1745 = sbr.rel (0) target = $region77
    $region76: #{tpu_custom_call.1} parent=1 // pred_region
      %1746 = dma.done [#allocation6], 1024
    $region77: #{tpu_custom_call.1} parent=1 // pred_fallthru
      _
    %1747 = vsyncpa [#allocation5], 1
    %1748 = vsyncpa [#allocation8], 1
    %1749 = vsyncpa [#allocation11], 1
    %1750 = vsyncpa [#allocation14], 1
    %1751 = vsyncpa [#allocation17], 1
    %1752 = vsyncpa [#allocation6], 1

</llo_original>
